<compile_context>
chip_gen: v7x
topology: tpu7x:2x2x1
jax: 0.10.0
libtpu: 0.0.40
codegen_flags: <defaults>
</compile_context>

<pallas_src>
import functools

import jax
import jax.numpy as jnp
from jax import lax
from jax.experimental import pallas as pl
from jax.experimental.pallas import tpu as pltpu


# ------------------------------ Pallas kernel ------------------------------ #
def _mnist_bayes_rnn_kernel(*refs, input_dim, hidden_dim, seq_len, batch, n_head):
    D, H, L, N = input_dim, hidden_dim, seq_len, batch
    n_hp = 2 * (n_head + 1)                       # (w, b) pairs incl. output layer

    x_ref, wx_ref, u_ref, bg_ref = refs[0], refs[1], refs[2], refs[3]
    head_refs = refs[4:4 + n_hp]
    hout_ref, prob_ref, xproj_sc = refs[4 + n_hp], refs[5 + n_hp], refs[6 + n_hp]

    # ---- Phase 1: batched input projection for all timesteps (one matmul). ----
    # x_ref is time-major (L*N, D) bf16; bias (bw + bu) is folded in here once.
    xproj_sc[...] = (
        jnp.dot(x_ref[...], wx_ref[...], preferred_element_type=jnp.float32)
        + bg_ref[...])

    # ---- Phase 2: lean serial recurrence: gates = xproj[t] + h @ U. ----
    u = u_ref[...]                                # (H, 4H) bf16, hoisted out of loop

    def step(t, carry):
        h, c = carry                              # f32 carries
        if isinstance(t, int):                    # static unroll path
            row = t * N
        else:                                     # fori_loop path
            row = pl.multiple_of(t * N, N)
        gates = xproj_sc[pl.ds(row, N), :] + jnp.dot(
            h.astype(jnp.bfloat16), u, preferred_element_type=jnp.float32)

        s = jax.nn.sigmoid(gates)                 # one full-width EUP pass
        f_t = s[:, 0 * H:1 * H]
        i_t = s[:, 1 * H:2 * H]
        o_t = s[:, 2 * H:3 * H]
        g_t = jnp.tanh(gates[:, 3 * H:4 * H])     # tanh only on the c_hat quarter

        c = f_t * c + i_t * g_t                   # cell state stays f32
        h = o_t * jnp.tanh(c)

        # Time-major hidden slab: lane offset 0, sublane-aligned row offset.
        hout_ref[pl.ds(row, N), :] = h.astype(hout_ref.dtype)
        return h, c

    h0 = jnp.zeros((N, H), jnp.float32)
    c0 = jnp.zeros((N, H), jnp.float32)
    if L <= 16:
        carry = (h0, c0)
        for t in range(L):                        # static unroll: full LLO visibility
            carry = step(t, carry)
    else:
        # Bounded vreg live ranges for long sequences (review item).
        carry = lax.fori_loop(0, L, step, (h0, c0), unroll=4)

    # ---- Phase 3: FC head hoisted out of the loop, over the whole slab. ----
    z = hout_ref[...]                             # (L*N, H) f32
    for li in range(n_head):
        w_l = head_refs[2 * li][...]              # (in, out) bf16
        b_l = head_refs[2 * li + 1][...]          # (1, out)  f32
        z = jnp.maximum(
            jnp.dot(z.astype(jnp.bfloat16), w_l,
                    preferred_element_type=jnp.float32) + b_l, 0.0)

    # Output layer as a row-vector lane-reduce (avoids a width-1 MXU matmul).
    w_o = head_refs[2 * n_head][...]              # (1, D_last) f32
    b_o = head_refs[2 * n_head + 1][...]          # (1, 1)      f32
    logit = jnp.sum(z * w_o, axis=1, keepdims=True) + b_o     # (L*N, 1)
    prob_ref[...] = jax.nn.sigmoid(logit).astype(prob_ref.dtype)   # one dense store


# --------------------------------- wrapper --------------------------------- #
def mnist_bayes_rnn_forward(inputs, lstm_wx, lstm_u, lstm_bias,
                            head_weights, head_biases):
    """Full MnistBayesRNN forward.

    inputs:    (N, L, *image_dims), batch-first (flattened to features here,
               mirroring `inputs.flatten(2, -1)` in the module).
    lstm_wx:   (D_in, 4H) input gate weights [Wf|Wi|Wo|Wc] (math layout y = x@W).
    lstm_u:    (H, 4H)    recurrent gate weights [Uf|Ui|Uo|Uc].
    lstm_bias: (4H,)      fused gate bias (bw + bu).
    head_weights/head_biases: hidden head layers followed by the output layer.

    Returns (probs (N, L, 1), lstm_out (N, L, H)).
    """
    N, L = inputs.shape[:2]
    x = inputs.reshape(N, L, -1).astype(jnp.float32)        # flatten(2,-1) + .float()
    D = x.shape[-1]
    H = lstm_u.shape[0]
    assert lstm_wx.shape == (D, 4 * H) and lstm_u.shape == (H, 4 * H)

    # Time-major so each step's rows are a sublane-contiguous block at lane 0.
    x_tm = jnp.transpose(x, (1, 0, 2)).reshape(L * N, D).astype(jnp.bfloat16)

    n_head = len(head_weights) - 1
    head_args = []
    for w, b in zip(head_weights[:-1], head_biases[:-1]):
        head_args += [jnp.asarray(w, jnp.bfloat16),                 # matmul operand
                      jnp.asarray(b, jnp.float32).reshape(1, -1)]   # f32 bias
    # Output layer weight as a row vector (lane-reduce in the kernel), f32.
    head_args += [jnp.asarray(head_weights[-1], jnp.float32).reshape(1, -1),
                  jnp.asarray(head_biases[-1], jnp.float32).reshape(1, 1)]

    args = [x_tm,
            jnp.asarray(lstm_wx, jnp.bfloat16),
            jnp.asarray(lstm_u, jnp.bfloat16),
            jnp.asarray(lstm_bias, jnp.float32).reshape(1, -1)] + head_args

    kernel = functools.partial(_mnist_bayes_rnn_kernel,
                               input_dim=D, hidden_dim=H,
                               seq_len=L, batch=N, n_head=n_head)

    def _full2d(shape):
        return pl.BlockSpec(shape, lambda i: (0, 0))

    hout_tm, probs_tm = pl.pallas_call(
        kernel,
        out_shape=(jax.ShapeDtypeStruct((L * N, H), jnp.float32),
                   jax.ShapeDtypeStruct((L * N, 1), jnp.float32)),
        grid_spec=pltpu.PrefetchScalarGridSpec(
            num_scalar_prefetch=0,
            grid=(1,),                                      # single invocation
            in_specs=[_full2d(a.shape) for a in args],
            out_specs=[_full2d((L * N, H)), _full2d((L * N, 1))],
            scratch_shapes=[pltpu.VMEM((L * N, 4 * H), jnp.float32)],  # xproj
        ),
        compiler_params=pltpu.CompilerParams(
            dimension_semantics=("arbitrary",),
            vmem_limit_bytes=32 * 1024 * 1024),
    )(*args)

    # Free XLA transposes back to batch-first.
    lstm_out = hout_tm.reshape(L, N, H).transpose(1, 0, 2)
    probs = probs_tm.reshape(L, N, 1).transpose(1, 0, 2)
    return probs, lstm_out


# ---------------------- Pure-JAX reference (for check) --------------------- #
def _reference(x_img, w_list, bw_list, u_list, bu_list, head_ws, head_bs):
    N, L = x_img.shape[:2]
    x = x_img.reshape(N, L, -1).astype(jnp.float32)
    H = u_list[0].shape[0]
    xs = jnp.transpose(x, (1, 0, 2))                       # (L, N, D)

    def step(carry, x_t):
        h, c = carry
        xg = [x_t @ w + b for w, b in zip(w_list, bw_list)]
        hg = [h @ u + b for u, b in zip(u_list, bu_list)]
        f = jax.nn.sigmoid(xg[0] + hg[0])
        i = jax.nn.sigmoid(xg[1] + hg[1])
        o = jax.nn.sigmoid(xg[2] + hg[2])
        g = jnp.tanh(xg[3] + hg[3])
        c = f * c + i * g
        h = o * jnp.tanh(c)
        return (h, c), h

    init = (jnp.zeros((N, H), jnp.float32), jnp.zeros((N, H), jnp.float32))
    _, hs = lax.scan(step, init, xs)                       # (L, N, H)
    out = jnp.transpose(hs, (1, 0, 2))                     # (N, L, H)

    z = out.reshape(N * L, H)
    for w, b in zip(head_ws[:-1], head_bs[:-1]):
        z = jnp.maximum(z @ w + b, 0.0)                    # dropout(eval) -> relu
    logits = z @ head_ws[-1] + head_bs[-1]
    probs = jax.nn.sigmoid(logits).reshape(N, L, 1)
    return probs, out


# ----------------------------------- main ----------------------------------- #
if __name__ == "__main__":
    # Small shapes consistent with the module; batch = 8 fills the sublane height.
    N, L = 8, 8
    IMG = (4, 4)
    D_IN = IMG[0] * IMG[1]          # 16 features after flatten(2, -1)
    H = 32                          # 4H = 128: one full lane-tile of gates
    LINEAR_DIMS = [H, 16]           # head: 32 -> 16 -> (output) 1

    key = jax.random.PRNGKey(0)
    keys = jax.random.split(key, 16)

    def bayes_linear_sample(k, in_f, out_f):
        # One stochastic forward draw of torchbnn.BayesLinear (math layout y = x@W + b).
        km, ks, ke, kbm, kbs, kbe = jax.random.split(k, 6)
        w_mu = 0.1 * jax.random.normal(km, (in_f, out_f), jnp.float32)
        w_ls = -3.0 + 0.1 * jax.random.normal(ks, (in_f, out_f), jnp.float32)
        w = w_mu + jnp.exp(w_ls) * jax.random.normal(ke, (in_f, out_f), jnp.float32)
        b_mu = 0.1 * jax.random.normal(kbm, (out_f,), jnp.float32)
        b_ls = -3.0 + 0.1 * jax.random.normal(kbs, (out_f,), jnp.float32)
        b = b_mu + jnp.exp(b_ls) * jax.random.normal(kbe, (out_f,), jnp.float32)
        return w, b

    # BayesLSTM: 4 input projections (D_IN->H) and 4 recurrent ones (H->H),
    # gate order [f, i, o, c_hat].
    w_list, bw_list, u_list, bu_list = [], [], [], []
    for g in range(4):
        w, bw = bayes_linear_sample(keys[g], D_IN, H)
        u, bu = bayes_linear_sample(keys[4 + g], H, H)
        w_list.append(w); bw_list.append(bw)
        u_list.append(u); bu_list.append(bu)

    # Head layers per linear_dims, then the output layer (-> 1).
    head_ws, head_bs = [], []
    for i in range(len(LINEAR_DIMS) - 1):
        w, b = bayes_linear_sample(keys[8 + i], LINEAR_DIMS[i], LINEAR_DIMS[i + 1])
        head_ws.append(w); head_bs.append(b)
    w_out, b_out = bayes_linear_sample(keys[12], LINEAR_DIMS[-1], 1)
    head_ws.append(w_out); head_bs.append(b_out)

    # Pack the gate weights: Wx = [Wf|Wi|Wo|Wc], U = [Uf|Ui|Uo|Uc], bias = bw+bu.
    wx = jnp.concatenate(w_list, axis=1)                   # (D_IN, 4H)
    uu = jnp.concatenate(u_list, axis=1)                   # (H, 4H)
    bgate = jnp.concatenate([bw + bu for bw, bu in zip(bw_list, bu_list)], axis=0)  # (4H,)

    x_img = jax.random.normal(keys[13], (N, L) + IMG, jnp.float32)   # batch of sequences

    probs, lstm_out = mnist_bayes_rnn_forward(x_img, wx, uu, bgate, head_ws, head_bs)
    jax.block_until_ready((probs, lstm_out))

    ref_probs, ref_lstm = _reference(x_img, w_list, bw_list, u_list, bu_list,
                                     head_ws, head_bs)

    assert probs.shape == (N, L, 1)
    assert lstm_out.shape == (N, L, H)
    # Matmul operands are bf16 in the kernel (per the perf review); the pure-f32
    # reference therefore differs at the ~1e-3 level, so tolerances are loosened.
    assert jnp.allclose(lstm_out, ref_lstm, atol=3e-2, rtol=3e-2)
    assert jnp.allclose(probs, ref_probs, atol=3e-2, rtol=3e-2)

    print("KERNEL_OK")
</pallas_src>

<mosaic_0001>
module attributes {stable_mosaic.version = 11 : i64} {
  func.func @_mnist_bayes_rnn_kernel(%arg0: i32, %arg1: memref<64x16xbf16, #tpu.memory_space<vmem>>, %arg2: memref<16x128xbf16, #tpu.memory_space<vmem>>, %arg3: memref<32x128xbf16, #tpu.memory_space<vmem>>, %arg4: memref<1x128xf32, #tpu.memory_space<vmem>>, %arg5: memref<32x16xbf16, #tpu.memory_space<vmem>>, %arg6: memref<1x16xf32, #tpu.memory_space<vmem>>, %arg7: memref<1x16xf32, #tpu.memory_space<vmem>>, %arg8: memref<1x1xf32, #tpu.memory_space<vmem>>, %arg9: memref<64x32xf32, #tpu.memory_space<vmem>>, %arg10: memref<64x1xf32, #tpu.memory_space<vmem>>, %arg11: memref<64x128xf32, #tpu.memory_space<vmem>>) attributes {dimension_semantics = [#tpu.dimension_semantics<arbitrary>], iteration_bounds = array<i64: 1>, scalar_prefetch = 0 : i64, scratch_operands = 1 : i64, tpu.core_type = #tpu.core_type<tc>, window_params = [{pipeline_mode = #tpu.pipeline_mode<synchronous>, transform_indices = @transform_0, window_bounds = array<i64: 64, 16>}, {pipeline_mode = #tpu.pipeline_mode<synchronous>, transform_indices = @transform_1, window_bounds = array<i64: 16, 128>}, {pipeline_mode = #tpu.pipeline_mode<synchronous>, transform_indices = @transform_2, window_bounds = array<i64: 32, 128>}, {pipeline_mode = #tpu.pipeline_mode<synchronous>, transform_indices = @transform_3, window_bounds = array<i64: 1, 128>}, {pipeline_mode = #tpu.pipeline_mode<synchronous>, transform_indices = @transform_4, window_bounds = array<i64: 32, 16>}, {pipeline_mode = #tpu.pipeline_mode<synchronous>, transform_indices = @transform_5, window_bounds = array<i64: 1, 16>}, {pipeline_mode = #tpu.pipeline_mode<synchronous>, transform_indices = @transform_6, window_bounds = array<i64: 1, 16>}, {pipeline_mode = #tpu.pipeline_mode<synchronous>, transform_indices = @transform_7, window_bounds = array<i64: 1, 1>}, {pipeline_mode = #tpu.pipeline_mode<synchronous>, transform_indices = @transform_8, window_bounds = array<i64: 64, 32>}, {pipeline_mode = #tpu.pipeline_mode<synchronous>, transform_indices = @transform_9, window_bounds = array<i64: 64, 1>}]} {
    %c0 = arith.constant 0 : index
    %c0_0 = arith.constant 0 : index
    %0 = vector.load %arg1[%c0, %c0_0] : memref<64x16xbf16, #tpu.memory_space<vmem>>, vector<64x16xbf16>
    %c0_1 = arith.constant 0 : index
    %c0_2 = arith.constant 0 : index
    %1 = vector.load %arg2[%c0_1, %c0_2] : memref<16x128xbf16, #tpu.memory_space<vmem>>, vector<16x128xbf16>
    %cst = arith.constant dense<0.000000e+00> : vector<64x128xf32>
    %2 = tpu.matmul %0, %1, %cst {dimension_numbers = #tpu.dot_dimension_numbers<[1], [0], [0], [1], [0, 0, 1, 1], [], []>} : vector<64x16xbf16>, vector<16x128xbf16>, vector<64x128xf32> -> vector<64x128xf32>
    %c0_3 = arith.constant 0 : index
    %c0_4 = arith.constant 0 : index
    %3 = vector.load %arg4[%c0_3, %c0_4] : memref<1x128xf32, #tpu.memory_space<vmem>>, vector<1x128xf32>
    %4 = vector.broadcast %3 : vector<1x128xf32> to vector<64x128xf32>
    %5 = arith.addf %2, %4 : vector<64x128xf32>
    %c0_5 = arith.constant 0 : index
    %c0_6 = arith.constant 0 : index
    %6 = vector.load %arg11[%c0_5, %c0_6] : memref<64x128xf32, #tpu.memory_space<vmem>>, vector<64x128xf32>
    tpu.vector_store %arg11[%c0_5, %c0_6], %5 {strides = array<i32>} : memref<64x128xf32, #tpu.memory_space<vmem>>, vector<64x128xf32>,
    %c0_7 = arith.constant 0 : index
    %c0_8 = arith.constant 0 : index
    %7 = vector.load %arg3[%c0_7, %c0_8] : memref<32x128xbf16, #tpu.memory_space<vmem>>, vector<32x128xbf16>
    %cst_9 = arith.constant 0.000000e+00 : f32
    %8 = vector.broadcast %cst_9 : f32 to vector<8x32xf32>
    %cst_10 = arith.constant 0.000000e+00 : f32
    %9 = vector.broadcast %cst_10 : f32 to vector<8x32xf32>
    %c0_11 = arith.constant 0 : index
    %c0_12 = arith.constant 0 : index
    %10 = vector.load %arg11[%c0_11, %c0_12] : memref<64x128xf32, #tpu.memory_space<vmem>>, vector<8x128xf32>
    %11 = arith.truncf %8 : vector<8x32xf32> to vector<8x32xbf16>
    %cst_13 = arith.constant dense<0.000000e+00> : vector<8x128xf32>
    %12 = tpu.matmul %11, %7, %cst_13 {dimension_numbers = #tpu.dot_dimension_numbers<[1], [0], [0], [1], [0, 0, 1, 1], [], []>} : vector<8x32xbf16>, vector<32x128xbf16>, vector<8x128xf32> -> vector<8x128xf32>
    %13 = arith.addf %10, %12 : vector<8x128xf32>
    %14 = arith.negf %13 : vector<8x128xf32>
    %15 = math.exp %14 : vector<8x128xf32>
    %cst_14 = arith.constant 1.000000e+00 : f32
    %16 = vector.broadcast %cst_14 : f32 to vector<8x128xf32>
    %17 = arith.addf %16, %15 : vector<8x128xf32>
    %18 = arith.divf %16, %17 : vector<8x128xf32>
    %19 = vector.extract_strided_slice %18 {offsets = [0, 0], sizes = [8, 32], strides = [1, 1]} : vector<8x128xf32> to vector<8x32xf32>
    %20 = vector.extract_strided_slice %18 {offsets = [0, 32], sizes = [8, 32], strides = [1, 1]} : vector<8x128xf32> to vector<8x32xf32>
    %21 = vector.extract_strided_slice %18 {offsets = [0, 64], sizes = [8, 32], strides = [1, 1]} : vector<8x128xf32> to vector<8x32xf32>
    %22 = vector.extract_strided_slice %13 {offsets = [0, 96], sizes = [8, 32], strides = [1, 1]} : vector<8x128xf32> to vector<8x32xf32>
    %23 = math.tanh %22 : vector<8x32xf32>
    %24 = arith.mulf %19, %9 : vector<8x32xf32>
    %25 = arith.mulf %20, %23 : vector<8x32xf32>
    %26 = arith.addf %24, %25 : vector<8x32xf32>
    %27 = math.tanh %26 : vector<8x32xf32>
    %28 = arith.mulf %21, %27 : vector<8x32xf32>
    %c0_15 = arith.constant 0 : index
    %c0_16 = arith.constant 0 : index
    %29 = vector.load %arg9[%c0_15, %c0_16] : memref<64x32xf32, #tpu.memory_space<vmem>>, vector<8x32xf32>
    tpu.vector_store %arg9[%c0_15, %c0_16], %28 {strides = array<i32>} : memref<64x32xf32, #tpu.memory_space<vmem>>, vector<8x32xf32>,
    %c8 = arith.constant 8 : index
    %c0_17 = arith.constant 0 : index
    %30 = vector.load %arg11[%c8, %c0_17] : memref<64x128xf32, #tpu.memory_space<vmem>>, vector<8x128xf32>
    %31 = arith.truncf %28 : vector<8x32xf32> to vector<8x32xbf16>
    %cst_18 = arith.constant dense<0.000000e+00> : vector<8x128xf32>
    %32 = tpu.matmul %31, %7, %cst_18 {dimension_numbers = #tpu.dot_dimension_numbers<[1], [0], [0], [1], [0, 0, 1, 1], [], []>} : vector<8x32xbf16>, vector<32x128xbf16>, vector<8x128xf32> -> vector<8x128xf32>
    %33 = arith.addf %30, %32 : vector<8x128xf32>
    %34 = arith.negf %33 : vector<8x128xf32>
    %35 = math.exp %34 : vector<8x128xf32>
    %cst_19 = arith.constant 1.000000e+00 : f32
    %36 = vector.broadcast %cst_19 : f32 to vector<8x128xf32>
    %37 = arith.addf %36, %35 : vector<8x128xf32>
    %38 = arith.divf %36, %37 : vector<8x128xf32>
    %39 = vector.extract_strided_slice %38 {offsets = [0, 0], sizes = [8, 32], strides = [1, 1]} : vector<8x128xf32> to vector<8x32xf32>
    %40 = vector.extract_strided_slice %38 {offsets = [0, 32], sizes = [8, 32], strides = [1, 1]} : vector<8x128xf32> to vector<8x32xf32>
    %41 = vector.extract_strided_slice %38 {offsets = [0, 64], sizes = [8, 32], strides = [1, 1]} : vector<8x128xf32> to vector<8x32xf32>
    %42 = vector.extract_strided_slice %33 {offsets = [0, 96], sizes = [8, 32], strides = [1, 1]} : vector<8x128xf32> to vector<8x32xf32>
    %43 = math.tanh %42 : vector<8x32xf32>
    %44 = arith.mulf %39, %26 : vector<8x32xf32>
    %45 = arith.mulf %40, %43 : vector<8x32xf32>
    %46 = arith.addf %44, %45 : vector<8x32xf32>
    %47 = math.tanh %46 : vector<8x32xf32>
    %48 = arith.mulf %41, %47 : vector<8x32xf32>
    %c8_20 = arith.constant 8 : index
    %c0_21 = arith.constant 0 : index
    %49 = vector.load %arg9[%c8_20, %c0_21] : memref<64x32xf32, #tpu.memory_space<vmem>>, vector<8x32xf32>
    tpu.vector_store %arg9[%c8_20, %c0_21], %48 {strides = array<i32>} : memref<64x32xf32, #tpu.memory_space<vmem>>, vector<8x32xf32>,
    %c16 = arith.constant 16 : index
    %c0_22 = arith.constant 0 : index
    %50 = vector.load %arg11[%c16, %c0_22] : memref<64x128xf32, #tpu.memory_space<vmem>>, vector<8x128xf32>
    %51 = arith.truncf %48 : vector<8x32xf32> to vector<8x32xbf16>
    %cst_23 = arith.constant dense<0.000000e+00> : vector<8x128xf32>
    %52 = tpu.matmul %51, %7, %cst_23 {dimension_numbers = #tpu.dot_dimension_numbers<[1], [0], [0], [1], [0, 0, 1, 1], [], []>} : vector<8x32xbf16>, vector<32x128xbf16>, vector<8x128xf32> -> vector<8x128xf32>
    %53 = arith.addf %50, %52 : vector<8x128xf32>
    %54 = arith.negf %53 : vector<8x128xf32>
    %55 = math.exp %54 : vector<8x128xf32>
    %cst_24 = arith.constant 1.000000e+00 : f32
    %56 = vector.broadcast %cst_24 : f32 to vector<8x128xf32>
    %57 = arith.addf %56, %55 : vector<8x128xf32>
    %58 = arith.divf %56, %57 : vector<8x128xf32>
    %59 = vector.extract_strided_slice %58 {offsets = [0, 0], sizes = [8, 32], strides = [1, 1]} : vector<8x128xf32> to vector<8x32xf32>
    %60 = vector.extract_strided_slice %58 {offsets = [0, 32], sizes = [8, 32], strides = [1, 1]} : vector<8x128xf32> to vector<8x32xf32>
    %61 = vector.extract_strided_slice %58 {offsets = [0, 64], sizes = [8, 32], strides = [1, 1]} : vector<8x128xf32> to vector<8x32xf32>
    %62 = vector.extract_strided_slice %53 {offsets = [0, 96], sizes = [8, 32], strides = [1, 1]} : vector<8x128xf32> to vector<8x32xf32>
    %63 = math.tanh %62 : vector<8x32xf32>
    %64 = arith.mulf %59, %46 : vector<8x32xf32>
    %65 = arith.mulf %60, %63 : vector<8x32xf32>
    %66 = arith.addf %64, %65 : vector<8x32xf32>
    %67 = math.tanh %66 : vector<8x32xf32>
    %68 = arith.mulf %61, %67 : vector<8x32xf32>
    %c16_25 = arith.constant 16 : index
    %c0_26 = arith.constant 0 : index
    %69 = vector.load %arg9[%c16_25, %c0_26] : memref<64x32xf32, #tpu.memory_space<vmem>>, vector<8x32xf32>
    tpu.vector_store %arg9[%c16_25, %c0_26], %68 {strides = array<i32>} : memref<64x32xf32, #tpu.memory_space<vmem>>, vector<8x32xf32>,
    %c24 = arith.constant 24 : index
    %c0_27 = arith.constant 0 : index
    %70 = vector.load %arg11[%c24, %c0_27] : memref<64x128xf32, #tpu.memory_space<vmem>>, vector<8x128xf32>
    %71 = arith.truncf %68 : vector<8x32xf32> to vector<8x32xbf16>
    %cst_28 = arith.constant dense<0.000000e+00> : vector<8x128xf32>
    %72 = tpu.matmul %71, %7, %cst_28 {dimension_numbers = #tpu.dot_dimension_numbers<[1], [0], [0], [1], [0, 0, 1, 1], [], []>} : vector<8x32xbf16>, vector<32x128xbf16>, vector<8x128xf32> -> vector<8x128xf32>
    %73 = arith.addf %70, %72 : vector<8x128xf32>
    %74 = arith.negf %73 : vector<8x128xf32>
    %75 = math.exp %74 : vector<8x128xf32>
    %cst_29 = arith.constant 1.000000e+00 : f32
    %76 = vector.broadcast %cst_29 : f32 to vector<8x128xf32>
    %77 = arith.addf %76, %75 : vector<8x128xf32>
    %78 = arith.divf %76, %77 : vector<8x128xf32>
    %79 = vector.extract_strided_slice %78 {offsets = [0, 0], sizes = [8, 32], strides = [1, 1]} : vector<8x128xf32> to vector<8x32xf32>
    %80 = vector.extract_strided_slice %78 {offsets = [0, 32], sizes = [8, 32], strides = [1, 1]} : vector<8x128xf32> to vector<8x32xf32>
    %81 = vector.extract_strided_slice %78 {offsets = [0, 64], sizes = [8, 32], strides = [1, 1]} : vector<8x128xf32> to vector<8x32xf32>
    %82 = vector.extract_strided_slice %73 {offsets = [0, 96], sizes = [8, 32], strides = [1, 1]} : vector<8x128xf32> to vector<8x32xf32>
    %83 = math.tanh %82 : vector<8x32xf32>
    %84 = arith.mulf %79, %66 : vector<8x32xf32>
    %85 = arith.mulf %80, %83 : vector<8x32xf32>
    %86 = arith.addf %84, %85 : vector<8x32xf32>
    %87 = math.tanh %86 : vector<8x32xf32>
    %88 = arith.mulf %81, %87 : vector<8x32xf32>
    %c24_30 = arith.constant 24 : index
    %c0_31 = arith.constant 0 : index
    %89 = vector.load %arg9[%c24_30, %c0_31] : memref<64x32xf32, #tpu.memory_space<vmem>>, vector<8x32xf32>
    tpu.vector_store %arg9[%c24_30, %c0_31], %88 {strides = array<i32>} : memref<64x32xf32, #tpu.memory_space<vmem>>, vector<8x32xf32>,
    %c32 = arith.constant 32 : index
    %c0_32 = arith.constant 0 : index
    %90 = vector.load %arg11[%c32, %c0_32] : memref<64x128xf32, #tpu.memory_space<vmem>>, vector<8x128xf32>
    %91 = arith.truncf %88 : vector<8x32xf32> to vector<8x32xbf16>
    %cst_33 = arith.constant dense<0.000000e+00> : vector<8x128xf32>
    %92 = tpu.matmul %91, %7, %cst_33 {dimension_numbers = #tpu.dot_dimension_numbers<[1], [0], [0], [1], [0, 0, 1, 1], [], []>} : vector<8x32xbf16>, vector<32x128xbf16>, vector<8x128xf32> -> vector<8x128xf32>
    %93 = arith.addf %90, %92 : vector<8x128xf32>
    %94 = arith.negf %93 : vector<8x128xf32>
    %95 = math.exp %94 : vector<8x128xf32>
    %cst_34 = arith.constant 1.000000e+00 : f32
    %96 = vector.broadcast %cst_34 : f32 to vector<8x128xf32>
    %97 = arith.addf %96, %95 : vector<8x128xf32>
    %98 = arith.divf %96, %97 : vector<8x128xf32>
    %99 = vector.extract_strided_slice %98 {offsets = [0, 0], sizes = [8, 32], strides = [1, 1]} : vector<8x128xf32> to vector<8x32xf32>
    %100 = vector.extract_strided_slice %98 {offsets = [0, 32], sizes = [8, 32], strides = [1, 1]} : vector<8x128xf32> to vector<8x32xf32>
    %101 = vector.extract_strided_slice %98 {offsets = [0, 64], sizes = [8, 32], strides = [1, 1]} : vector<8x128xf32> to vector<8x32xf32>
    %102 = vector.extract_strided_slice %93 {offsets = [0, 96], sizes = [8, 32], strides = [1, 1]} : vector<8x128xf32> to vector<8x32xf32>
    %103 = math.tanh %102 : vector<8x32xf32>
    %104 = arith.mulf %99, %86 : vector<8x32xf32>
    %105 = arith.mulf %100, %103 : vector<8x32xf32>
    %106 = arith.addf %104, %105 : vector<8x32xf32>
    %107 = math.tanh %106 : vector<8x32xf32>
    %108 = arith.mulf %101, %107 : vector<8x32xf32>
    %c32_35 = arith.constant 32 : index
    %c0_36 = arith.constant 0 : index
    %109 = vector.load %arg9[%c32_35, %c0_36] : memref<64x32xf32, #tpu.memory_space<vmem>>, vector<8x32xf32>
    tpu.vector_store %arg9[%c32_35, %c0_36], %108 {strides = array<i32>} : memref<64x32xf32, #tpu.memory_space<vmem>>, vector<8x32xf32>,
    %c40 = arith.constant 40 : index
    %c0_37 = arith.constant 0 : index
    %110 = vector.load %arg11[%c40, %c0_37] : memref<64x128xf32, #tpu.memory_space<vmem>>, vector<8x128xf32>
    %111 = arith.truncf %108 : vector<8x32xf32> to vector<8x32xbf16>
    %cst_38 = arith.constant dense<0.000000e+00> : vector<8x128xf32>
    %112 = tpu.matmul %111, %7, %cst_38 {dimension_numbers = #tpu.dot_dimension_numbers<[1], [0], [0], [1], [0, 0, 1, 1], [], []>} : vector<8x32xbf16>, vector<32x128xbf16>, vector<8x128xf32> -> vector<8x128xf32>
    %113 = arith.addf %110, %112 : vector<8x128xf32>
    %114 = arith.negf %113 : vector<8x128xf32>
    %115 = math.exp %114 : vector<8x128xf32>
    %cst_39 = arith.constant 1.000000e+00 : f32
    %116 = vector.broadcast %cst_39 : f32 to vector<8x128xf32>
    %117 = arith.addf %116, %115 : vector<8x128xf32>
    %118 = arith.divf %116, %117 : vector<8x128xf32>
    %119 = vector.extract_strided_slice %118 {offsets = [0, 0], sizes = [8, 32], strides = [1, 1]} : vector<8x128xf32> to vector<8x32xf32>
    %120 = vector.extract_strided_slice %118 {offsets = [0, 32], sizes = [8, 32], strides = [1, 1]} : vector<8x128xf32> to vector<8x32xf32>
    %121 = vector.extract_strided_slice %118 {offsets = [0, 64], sizes = [8, 32], strides = [1, 1]} : vector<8x128xf32> to vector<8x32xf32>
    %122 = vector.extract_strided_slice %113 {offsets = [0, 96], sizes = [8, 32], strides = [1, 1]} : vector<8x128xf32> to vector<8x32xf32>
    %123 = math.tanh %122 : vector<8x32xf32>
    %124 = arith.mulf %119, %106 : vector<8x32xf32>
    %125 = arith.mulf %120, %123 : vector<8x32xf32>
    %126 = arith.addf %124, %125 : vector<8x32xf32>
    %127 = math.tanh %126 : vector<8x32xf32>
    %128 = arith.mulf %121, %127 : vector<8x32xf32>
    %c40_40 = arith.constant 40 : index
    %c0_41 = arith.constant 0 : index
    %129 = vector.load %arg9[%c40_40, %c0_41] : memref<64x32xf32, #tpu.memory_space<vmem>>, vector<8x32xf32>
    tpu.vector_store %arg9[%c40_40, %c0_41], %128 {strides = array<i32>} : memref<64x32xf32, #tpu.memory_space<vmem>>, vector<8x32xf32>,
    %c48 = arith.constant 48 : index
    %c0_42 = arith.constant 0 : index
    %130 = vector.load %arg11[%c48, %c0_42] : memref<64x128xf32, #tpu.memory_space<vmem>>, vector<8x128xf32>
    %131 = arith.truncf %128 : vector<8x32xf32> to vector<8x32xbf16>
    %cst_43 = arith.constant dense<0.000000e+00> : vector<8x128xf32>
    %132 = tpu.matmul %131, %7, %cst_43 {dimension_numbers = #tpu.dot_dimension_numbers<[1], [0], [0], [1], [0, 0, 1, 1], [], []>} : vector<8x32xbf16>, vector<32x128xbf16>, vector<8x128xf32> -> vector<8x128xf32>
    %133 = arith.addf %130, %132 : vector<8x128xf32>
    %134 = arith.negf %133 : vector<8x128xf32>
    %135 = math.exp %134 : vector<8x128xf32>
    %cst_44 = arith.constant 1.000000e+00 : f32
    %136 = vector.broadcast %cst_44 : f32 to vector<8x128xf32>
    %137 = arith.addf %136, %135 : vector<8x128xf32>
    %138 = arith.divf %136, %137 : vector<8x128xf32>
    %139 = vector.extract_strided_slice %138 {offsets = [0, 0], sizes = [8, 32], strides = [1, 1]} : vector<8x128xf32> to vector<8x32xf32>
    %140 = vector.extract_strided_slice %138 {offsets = [0, 32], sizes = [8, 32], strides = [1, 1]} : vector<8x128xf32> to vector<8x32xf32>
    %141 = vector.extract_strided_slice %138 {offsets = [0, 64], sizes = [8, 32], strides = [1, 1]} : vector<8x128xf32> to vector<8x32xf32>
    %142 = vector.extract_strided_slice %133 {offsets = [0, 96], sizes = [8, 32], strides = [1, 1]} : vector<8x128xf32> to vector<8x32xf32>
    %143 = math.tanh %142 : vector<8x32xf32>
    %144 = arith.mulf %139, %126 : vector<8x32xf32>
    %145 = arith.mulf %140, %143 : vector<8x32xf32>
    %146 = arith.addf %144, %145 : vector<8x32xf32>
    %147 = math.tanh %146 : vector<8x32xf32>
    %148 = arith.mulf %141, %147 : vector<8x32xf32>
    %c48_45 = arith.constant 48 : index
    %c0_46 = arith.constant 0 : index
    %149 = vector.load %arg9[%c48_45, %c0_46] : memref<64x32xf32, #tpu.memory_space<vmem>>, vector<8x32xf32>
    tpu.vector_store %arg9[%c48_45, %c0_46], %148 {strides = array<i32>} : memref<64x32xf32, #tpu.memory_space<vmem>>, vector<8x32xf32>,
    %c56 = arith.constant 56 : index
    %c0_47 = arith.constant 0 : index
    %150 = vector.load %arg11[%c56, %c0_47] : memref<64x128xf32, #tpu.memory_space<vmem>>, vector<8x128xf32>
    %151 = arith.truncf %148 : vector<8x32xf32> to vector<8x32xbf16>
    %cst_48 = arith.constant dense<0.000000e+00> : vector<8x128xf32>
    %152 = tpu.matmul %151, %7, %cst_48 {dimension_numbers = #tpu.dot_dimension_numbers<[1], [0], [0], [1], [0, 0, 1, 1], [], []>} : vector<8x32xbf16>, vector<32x128xbf16>, vector<8x128xf32> -> vector<8x128xf32>
    %153 = arith.addf %150, %152 : vector<8x128xf32>
    %154 = arith.negf %153 : vector<8x128xf32>
    %155 = math.exp %154 : vector<8x128xf32>
    %cst_49 = arith.constant 1.000000e+00 : f32
    %156 = vector.broadcast %cst_49 : f32 to vector<8x128xf32>
    %157 = arith.addf %156, %155 : vector<8x128xf32>
    %158 = arith.divf %156, %157 : vector<8x128xf32>
    %159 = vector.extract_strided_slice %158 {offsets = [0, 0], sizes = [8, 32], strides = [1, 1]} : vector<8x128xf32> to vector<8x32xf32>
    %160 = vector.extract_strided_slice %158 {offsets = [0, 32], sizes = [8, 32], strides = [1, 1]} : vector<8x128xf32> to vector<8x32xf32>
    %161 = vector.extract_strided_slice %158 {offsets = [0, 64], sizes = [8, 32], strides = [1, 1]} : vector<8x128xf32> to vector<8x32xf32>
    %162 = vector.extract_strided_slice %153 {offsets = [0, 96], sizes = [8, 32], strides = [1, 1]} : vector<8x128xf32> to vector<8x32xf32>
    %163 = math.tanh %162 : vector<8x32xf32>
    %164 = arith.mulf %159, %146 : vector<8x32xf32>
    %165 = arith.mulf %160, %163 : vector<8x32xf32>
    %166 = arith.addf %164, %165 : vector<8x32xf32>
    %167 = math.tanh %166 : vector<8x32xf32>
    %168 = arith.mulf %161, %167 : vector<8x32xf32>
    %c56_50 = arith.constant 56 : index
    %c0_51 = arith.constant 0 : index
    %169 = vector.load %arg9[%c56_50, %c0_51] : memref<64x32xf32, #tpu.memory_space<vmem>>, vector<8x32xf32>
    tpu.vector_store %arg9[%c56_50, %c0_51], %168 {strides = array<i32>} : memref<64x32xf32, #tpu.memory_space<vmem>>, vector<8x32xf32>,
    %c0_52 = arith.constant 0 : index
    %c0_53 = arith.constant 0 : index
    %170 = vector.load %arg9[%c0_52, %c0_53] : memref<64x32xf32, #tpu.memory_space<vmem>>, vector<64x32xf32>
    %c0_54 = arith.constant 0 : index
    %c0_55 = arith.constant 0 : index
    %171 = vector.load %arg5[%c0_54, %c0_55] : memref<32x16xbf16, #tpu.memory_space<vmem>>, vector<32x16xbf16>
    %c0_56 = arith.constant 0 : index
    %c0_57 = arith.constant 0 : index
    %172 = vector.load %arg6[%c0_56, %c0_57] : memref<1x16xf32, #tpu.memory_space<vmem>>, vector<1x16xf32>
    %173 = arith.truncf %170 : vector<64x32xf32> to vector<64x32xbf16>
    %cst_58 = arith.constant dense<0.000000e+00> : vector<64x16xf32>
    %174 = tpu.matmul %173, %171, %cst_58 {dimension_numbers = #tpu.dot_dimension_numbers<[1], [0], [0], [1], [0, 0, 1, 1], [], []>} : vector<64x32xbf16>, vector<32x16xbf16>, vector<64x16xf32> -> vector<64x16xf32>
    %175 = vector.broadcast %172 : vector<1x16xf32> to vector<64x16xf32>
    %176 = arith.addf %174, %175 : vector<64x16xf32>
    %cst_59 = arith.constant 0.000000e+00 : f32
    %177 = vector.broadcast %cst_59 : f32 to vector<64x16xf32>
    %178 = arith.maximumf %176, %177 : vector<64x16xf32>
    %c0_60 = arith.constant 0 : index
    %c0_61 = arith.constant 0 : index
    %179 = vector.load %arg7[%c0_60, %c0_61] : memref<1x16xf32, #tpu.memory_space<vmem>>, vector<1x16xf32>
    %c0_62 = arith.constant 0 : index
    %c0_63 = arith.constant 0 : index
    %180 = vector.load %arg8[%c0_62, %c0_63] : memref<1x1xf32, #tpu.memory_space<vmem>>, vector<1x1xf32>
    %181 = vector.broadcast %179 : vector<1x16xf32> to vector<64x16xf32>
    %182 = arith.mulf %178, %181 : vector<64x16xf32>
    %cst_64 = arith.constant dense<0.000000e+00> : vector<64xf32>
    %183 = vector.multi_reduction <add>, %182, %cst_64 [1] : vector<64x16xf32> to vector<64xf32>
    %184 = vector.shape_cast %183 : vector<64xf32> to vector<64x1xf32>
    %185 = vector.broadcast %180 : vector<1x1xf32> to vector<64x1xf32>
    %186 = arith.addf %184, %185 : vector<64x1xf32>
    %187 = arith.negf %186 : vector<64x1xf32>
    %188 = math.exp %187 : vector<64x1xf32>
    %cst_65 = arith.constant 1.000000e+00 : f32
    %189 = vector.broadcast %cst_65 : f32 to vector<64x1xf32>
    %190 = arith.addf %189, %188 : vector<64x1xf32>
    %191 = arith.divf %189, %190 : vector<64x1xf32>
    %c0_66 = arith.constant 0 : index
    %c0_67 = arith.constant 0 : index
    %192 = vector.load %arg10[%c0_66, %c0_67] : memref<64x1xf32, #tpu.memory_space<vmem>>, vector<64x1xf32>
    tpu.vector_store %arg10[%c0_66, %c0_67], %191 {strides = array<i32>} : memref<64x1xf32, #tpu.memory_space<vmem>>, vector<64x1xf32>,
    return
  }
  func.func @transform_0(%arg0: i32) -> (i32, i32) {
    %c0_i32 = arith.constant 0 : i32
    %c0_i32_0 = arith.constant 0 : i32
    %c0_i32_1 = arith.constant 0 : i32
    return %c0_i32, %c0_i32_0 : i32, i32
  }
  func.func @transform_1(%arg0: i32) -> (i32, i32) {
    %c0_i32 = arith.constant 0 : i32
    %c0_i32_0 = arith.constant 0 : i32
    %c0_i32_1 = arith.constant 0 : i32
    return %c0_i32, %c0_i32_0 : i32, i32
  }
  func.func @transform_2(%arg0: i32) -> (i32, i32) {
    %c0_i32 = arith.constant 0 : i32
    %c0_i32_0 = arith.constant 0 : i32
    %c0_i32_1 = arith.constant 0 : i32
    return %c0_i32, %c0_i32_0 : i32, i32
  }
  func.func @transform_3(%arg0: i32) -> (i32, i32) {
    %c0_i32 = arith.constant 0 : i32
    %c0_i32_0 = arith.constant 0 : i32
    %c0_i32_1 = arith.constant 0 : i32
    return %c0_i32, %c0_i32_0 : i32, i32
  }
  func.func @transform_4(%arg0: i32) -> (i32, i32) {
    %c0_i32 = arith.constant 0 : i32
    %c0_i32_0 = arith.constant 0 : i32
    %c0_i32_1 = arith.constant 0 : i32
    return %c0_i32, %c0_i32_0 : i32, i32
  }
  func.func @transform_5(%arg0: i32) -> (i32, i32) {
    %c0_i32 = arith.constant 0 : i32
    %c0_i32_0 = arith.constant 0 : i32
    %c0_i32_1 = arith.constant 0 : i32
    return %c0_i32, %c0_i32_0 : i32, i32
  }
  func.func @transform_6(%arg0: i32) -> (i32, i32) {
    %c0_i32 = arith.constant 0 : i32
    %c0_i32_0 = arith.constant 0 : i32
    %c0_i32_1 = arith.constant 0 : i32
    return %c0_i32, %c0_i32_0 : i32, i32
  }
  func.func @transform_7(%arg0: i32) -> (i32, i32) {
    %c0_i32 = arith.constant 0 : i32
    %c0_i32_0 = arith.constant 0 : i32
    %c0_i32_1 = arith.constant 0 : i32
    return %c0_i32, %c0_i32_0 : i32, i32
  }
  func.func @transform_8(%arg0: i32) -> (i32, i32) {
    %c0_i32 = arith.constant 0 : i32
    %c0_i32_0 = arith.constant 0 : i32
    %c0_i32_1 = arith.constant 0 : i32
    return %c0_i32, %c0_i32_0 : i32, i32
  }
  func.func @transform_9(%arg0: i32) -> (i32, i32) {
    %c0_i32 = arith.constant 0 : i32
    %c0_i32_0 = arith.constant 0 : i32
    %c0_i32_1 = arith.constant 0 : i32
    return %c0_i32, %c0_i32_0 : i32, i32
  }
}

</mosaic_0001>

<llo_original>
// kernel: tpu_custom_call.1
$region0: #{tpu_custom_call.1}
  #allocation0 [shape = 'u32[]', space=smem, size = 0x4, offset = 0x4, fixed_abs, tag = 'smem constant byte address 0x4 - core index']
  #allocation1 [shape = 'u32[144,128]{1,0:T(1,128)}', space=vmem, size = 0x12000, scoped, tag = 'internal scratch']
  #allocation2 [shape = 'f32[64,128]{1,0:T(8,128)}', space=vmem, size = 0x8000, scoped, tag = 'scratch operand']
  #allocation3 [shape = 'f32[1,1]{1,0:T(1,128)S(1)}', space=vmem, size = 0x200, scoped, tag = 'scoped memory for tpu_custom_call.1']
  %s0 = inlined_call_operand.vmem [shape: bf16[64,16], index: 0, kind: input, shape index: {}]
  %s1 = inlined_call_operand.vmem [shape: bf16[16,128], index: 1, kind: input, shape index: {}]
  %s2 = inlined_call_operand.vmem [shape: bf16[32,128], index: 2, kind: input, shape index: {}]
  %s3 = inlined_call_operand.vmem [shape: f32[1,128], index: 3, kind: input, shape index: {}]
  %s4 = inlined_call_operand.vmem [shape: bf16[32,16], index: 4, kind: input, shape index: {}]
  %s5 = inlined_call_operand.vmem [shape: f32[1,16], index: 5, kind: input, shape index: {}]
  %s6 = inlined_call_operand.vmem [shape: f32[1,16], index: 6, kind: input, shape index: {}]
  %s7 = inlined_call_operand.<no memory space> [shape: f32[1,1], index: 7, kind: input, shape index: {}]
  %s8 = inlined_call_operand.vmem [shape: f32[64,32], index: 8, kind: output, shape index: {0}]
  %s9 = inlined_call_operand.vmem [shape: f32[64,1], index: 9, kind: output, shape index: {1}]
  %10 = xla_tuple %s8, %s9
  %s11 = sld [smem:[#allocation0]]
  $region50: #{tpu_custom_call.1} parent=0
    _
  %s13 = ssub.s32 1, %s11
  %s14 = scalar_select 0, %s13, %s11
  %v15 = vstv %s7
  %16 = vst [vmem:[#allocation3] sm:$0x1] %v15
  // Predicated region
  $region2: #{tpu_custom_call.1} parent=0 // pred_check
    _
  $region3: #{tpu_custom_call.1} parent=0 // pred_check_branch
    %18 = sbr.rel (0) target = $region5
  $region4: #{tpu_custom_call.1} parent=0 // pred_region
    _
  $region5: #{tpu_custom_call.1} parent=0 // pred_fallthru
    _
  // Predicated region
  $region6: #{tpu_custom_call.1} parent=0 // pred_check
    _
  $region7: #{tpu_custom_call.1} parent=0 // pred_check_branch
    %20 = sbr.rel (0) target = $region9
  $region8: #{tpu_custom_call.1} parent=0 // pred_region
    _
  $region9: #{tpu_custom_call.1} parent=0 // pred_fallthru
    _
  // Predicated region
  $region10: #{tpu_custom_call.1} parent=0 // pred_check
    _
  $region11: #{tpu_custom_call.1} parent=0 // pred_check_branch
    %22 = sbr.rel (0) target = $region13
  $region12: #{tpu_custom_call.1} parent=0 // pred_region
    _
  $region13: #{tpu_custom_call.1} parent=0 // pred_fallthru
    _
  // Predicated region
  $region14: #{tpu_custom_call.1} parent=0 // pred_check
    _
  $region15: #{tpu_custom_call.1} parent=0 // pred_check_branch
    %24 = sbr.rel (0) target = $region17
  $region16: #{tpu_custom_call.1} parent=0 // pred_region
    _
  $region17: #{tpu_custom_call.1} parent=0 // pred_fallthru
    _
  // Predicated region
  $region18: #{tpu_custom_call.1} parent=0 // pred_check
    _
  $region19: #{tpu_custom_call.1} parent=0 // pred_check_branch
    %26 = sbr.rel (0) target = $region21
  $region20: #{tpu_custom_call.1} parent=0 // pred_region
    _
  $region21: #{tpu_custom_call.1} parent=0 // pred_fallthru
    _
  // Predicated region
  $region22: #{tpu_custom_call.1} parent=0 // pred_check
    _
  $region23: #{tpu_custom_call.1} parent=0 // pred_check_branch
    %28 = sbr.rel (0) target = $region25
  $region24: #{tpu_custom_call.1} parent=0 // pred_region
    _
  $region25: #{tpu_custom_call.1} parent=0 // pred_fallthru
    _
  // Predicated region
  $region26: #{tpu_custom_call.1} parent=0 // pred_check
    _
  $region27: #{tpu_custom_call.1} parent=0 // pred_check_branch
    %30 = sbr.rel (0) target = $region29
  $region28: #{tpu_custom_call.1} parent=0 // pred_region
    _
  $region29: #{tpu_custom_call.1} parent=0 // pred_fallthru
    _
  // Predicated region
  $region30: #{tpu_custom_call.1} parent=0 // pred_check
    _
  $region31: #{tpu_custom_call.1} parent=0 // pred_check_branch
    %32 = sbr.rel (0) target = $region33
  $region32: #{tpu_custom_call.1} parent=0 // pred_region
    _
  $region33: #{tpu_custom_call.1} parent=0 // pred_fallthru
    _
  %v34 = vld [vmem:[%s0] sm:$0xf]
  %v35 = vld [vmem:[%s0 + $0x4] sm:$0xf]
  %v36 = vld [vmem:[%s0 + $0x8] sm:$0xf]
  %v37 = vld [vmem:[%s0 + $0xc] sm:$0xf]
  %v38 = vld [vmem:[%s0 + $0x10] sm:$0xf]
  %v39 = vld [vmem:[%s0 + $0x14] sm:$0xf]
  %v40 = vld [vmem:[%s0 + $0x18] sm:$0xf]
  %v41 = vld [vmem:[%s0 + $0x1c] sm:$0xf]
  %v42 = vld [vmem:[%s1] sm:$0xf]
  %v43 = vld [vmem:[%s1 + $0x4] sm:$0xf]
  %v44 = vld [vmem:[%s3] sm:$0x1]
  %v46 = vlaneseq
  %v47 = vshrl.u32 %v46, 7
  %v48 = vsub.s32 0, %v47
  %v49 = vrot.slane %v44, %v48
  %v59 = vunpack.c.l.b16 %v34
  %v60 = vunpack.c.l.b16 %v35
  %v61 = vunpack.c.l.b16 %v36
  %v62 = vunpack.c.l.b16 %v37
  %v63 = vunpack.c.l.b16 %v38
  %v64 = vunpack.c.l.b16 %v39
  %v65 = vunpack.c.l.b16 %v40
  %v66 = vunpack.c.l.b16 %v41
  %v67 = vpack.c.b16 %v60, %v59
  %v68 = vpack.c.b16 %v62, %v61
  %v69 = vpack.c.b16 %v64, %v63
  %v70 = vpack.c.b16 %v66, %v65
  %v73 = vunpack.c.l.b16 %v42
  %v74 = vunpack.c.l.b16 %v43
  %v75 = vpack.c.b16 %v74, %v73
  %vm77 = vcmask 130048
  %v79 = vsel %vm77, %v67, 0
  %v82 = vsel %vm77, %v68, 0
  %v85 = vsel %vm77, %v69, 0
  %v88 = vsel %vm77, %v70, 0
  %90 = vmatprep.subr.bf16.mxu0 0
  %91 = vmatpush1.bf16.msra.mxu0 %v75
  %92 = vmatprep.subr.bf16.mxu0 0
  %93 = vmatpush1.bf16.msra.mxu0 0
  %94 = vmatprep.subr.bf16.mxu0 0
  %95 = vmatpush1.bf16.msra.mxu0 0
  %96 = vmatprep.subr.bf16.mxu0 0
  %97 = vmatpush1.bf16.msra.mxu0 0
  %98 = vmatprep.subr.bf16.mxu0 0
  %99 = vmatpush1.bf16.msra.mxu0 0
  %100 = vmatprep.subr.bf16.mxu0 0
  %101 = vmatpush1.bf16.msra.mxu0 0
  %102 = vmatprep.subr.bf16.mxu0 0
  %103 = vmatpush1.bf16.msra.mxu0 0
  %104 = vmatprep.subr.bf16.mxu0 0
  %105 = vmatpush1.bf16.msra.mxu0 0
  %106 = vmatprep.subr.bf16.mxu0 0
  %107 = vmatpush1.bf16.msra.mxu0 0
  %108 = vmatprep.subr.bf16.mxu0 0
  %109 = vmatpush1.bf16.msra.mxu0 0
  %110 = vmatprep.subr.bf16.mxu0 0
  %111 = vmatpush1.bf16.msra.mxu0 0
  %112 = vmatprep.subr.bf16.mxu0 0
  %113 = vmatpush1.bf16.msra.mxu0 0
  %114 = vmatprep.subr.bf16.mxu0 0
  %115 = vmatpush1.bf16.msra.mxu0 0
  %116 = vmatprep.subr.bf16.mxu0 0
  %117 = vmatpush1.bf16.msra.mxu0 0
  %118 = vmatprep.subr.bf16.mxu0 0
  %119 = vmatpush1.bf16.msra.mxu0 0
  %120 = vmatprep.subr.bf16.mxu0 0
  %121 = vmatpush1.bf16.msra.mxu0 0
  %122 = vmatprep.mubr.bf16.mxu0 0
  %123 = vmatmul.mubr.bf16.gmra.mrb[0].mxu0 %v79
  %v124 = vpop.f32.mrb[0].mxu0
  %v125 = vadd.f32 %v49, %v124
  %v126 = vpop.f32.mrb[0].mxu0
  %v127 = vpop.f32.mrb[0].mxu0
  %v128 = vadd.f32 %v49, %v127
  %v129 = vpop.f32.mrb[0].mxu0
  %130 = vmatprep.mubr.bf16.mxu0 0
  %131 = vmatmul.mubr.bf16.gmra.mrb[0].mxu0 %v82
  %v132 = vpop.f32.mrb[0].mxu0
  %v133 = vadd.f32 %v49, %v132
  %v134 = vpop.f32.mrb[0].mxu0
  %v135 = vpop.f32.mrb[0].mxu0
  %v136 = vadd.f32 %v49, %v135
  %v137 = vpop.f32.mrb[0].mxu0
  %138 = vmatprep.mubr.bf16.mxu0 0
  %139 = vmatmul.mubr.bf16.gmra.mrb[0].mxu0 %v85
  %v140 = vpop.f32.mrb[0].mxu0
  %v141 = vadd.f32 %v49, %v140
  %v142 = vpop.f32.mrb[0].mxu0
  %v143 = vpop.f32.mrb[0].mxu0
  %v144 = vadd.f32 %v49, %v143
  %v145 = vpop.f32.mrb[0].mxu0
  %146 = vmatprep.mubr.bf16.mxu0 0
  %147 = vmatmul.mubr.bf16.gmra.mrb[0].mxu0 %v88
  %v148 = vpop.f32.mrb[0].mxu0
  %v149 = vadd.f32 %v49, %v148
  %v150 = vpop.f32.mrb[0].mxu0
  %v151 = vpop.f32.mrb[0].mxu0
  %v152 = vadd.f32 %v49, %v151
  %v153 = vpop.f32.mrb[0].mxu0
  %154 = vdwg.mxu0
  %155 = vst [vmem:[#allocation2] sm:$0xff] %v125
  %156 = vst [vmem:[#allocation2 + $0x8] sm:$0xff] %v128
  %157 = vst [vmem:[#allocation2 + $0x10] sm:$0xff] %v133
  %158 = vst [vmem:[#allocation2 + $0x18] sm:$0xff] %v136
  %159 = vst [vmem:[#allocation2 + $0x20] sm:$0xff] %v141
  %160 = vst [vmem:[#allocation2 + $0x28] sm:$0xff] %v144
  %161 = vst [vmem:[#allocation2 + $0x30] sm:$0xff] %v149
  %162 = vst [vmem:[#allocation2 + $0x38] sm:$0xff] %v152
  %v163 = vld [vmem:[%s2] sm:$0xf]
  %v164 = vld [vmem:[%s2 + $0x4] sm:$0xf]
  %v165 = vld [vmem:[%s2 + $0x8] sm:$0xf]
  %v166 = vld [vmem:[%s2 + $0xc] sm:$0xf]
  %v167 = vld [vmem:[#allocation2] sm:$0xff]
  %v172 = vunpack.c.l.b16 %v163
  %v173 = vunpack.c.l.b16 %v164
  %v174 = vunpack.c.l.b16 %v165
  %v175 = vunpack.c.l.b16 %v166
  %v176 = vpack.c.b16 %v173, %v172
  %v177 = vpack.c.b16 %v175, %v174
  %vm180 = vcmask 261120
  %v182 = vsel %vm180, 0, 0
  %184 = vmatprep.subr.bf16.mxu0 0
  %185 = vmatpush1.bf16.msra.mxu0 %v176
  %186 = vmatprep.subr.bf16.mxu0 0
  %187 = vmatpush1.bf16.msra.mxu0 %v177
  %188 = vmatprep.subr.bf16.mxu0 0
  %189 = vmatpush1.bf16.msra.mxu0 0
  %190 = vmatprep.subr.bf16.mxu0 0
  %191 = vmatpush1.bf16.msra.mxu0 0
  %192 = vmatprep.subr.bf16.mxu0 0
  %193 = vmatpush1.bf16.msra.mxu0 0
  %194 = vmatprep.subr.bf16.mxu0 0
  %195 = vmatpush1.bf16.msra.mxu0 0
  %196 = vmatprep.subr.bf16.mxu0 0
  %197 = vmatpush1.bf16.msra.mxu0 0
  %198 = vmatprep.subr.bf16.mxu0 0
  %199 = vmatpush1.bf16.msra.mxu0 0
  %200 = vmatprep.subr.bf16.mxu0 0
  %201 = vmatpush1.bf16.msra.mxu0 0
  %202 = vmatprep.subr.bf16.mxu0 0
  %203 = vmatpush1.bf16.msra.mxu0 0
  %204 = vmatprep.subr.bf16.mxu0 0
  %205 = vmatpush1.bf16.msra.mxu0 0
  %206 = vmatprep.subr.bf16.mxu0 0
  %207 = vmatpush1.bf16.msra.mxu0 0
  %208 = vmatprep.subr.bf16.mxu0 0
  %209 = vmatpush1.bf16.msra.mxu0 0
  %210 = vmatprep.subr.bf16.mxu0 0
  %211 = vmatpush1.bf16.msra.mxu0 0
  %212 = vmatprep.subr.bf16.mxu0 0
  %213 = vmatpush1.bf16.msra.mxu0 0
  %214 = vmatprep.subr.bf16.mxu0 0
  %215 = vmatpush1.bf16.msra.mxu0 0
  %216 = vmatprep.mubr.bf16.mxu0 0
  %217 = vmatmul.mubr.bf16.gmra.mrb[0].mxu0 %v182
  %v218 = vpop.f32.mrb[0].mxu0
  %v219 = vadd.f32 0.0, %v218
  %v220 = vpop.f32.mrb[0].mxu0
  %v221 = vpop.f32.mrb[0].mxu0
  %v222 = vpop.f32.mrb[0].mxu0
  %223 = vdwg.mxu0
  %v224 = vadd.f32 %v167, %v219
  %v225 = vxor.u32 %v224, 2147483648
  %v226 = vmul.f32 %v225, 1.442695
  %v227 = vpow.pop %v226
  %v228 = vadd.f32 %v227, 1.0
  %v229 = vrcp.pop %v228
  %v230 = vmul.f32 1.0, %v229
  %v231 = vtanh.pop %v224
  %v232 = vmul.f32 %v230, 0.0
  %234 = vrot.lane.b32.xlu0 %v231, 64
  %v235 = vpop.permute.xlu0 %234
  %v237 = vmul.f32 %v230, %v235
  %239 = vrot.lane.b32.xlu0 %v237, 96
  %v240 = vpop.permute.xlu0 %239
  %v242 = vadd.f32 %v232, %v240
  %v243 = vtanh.pop %v242
  %245 = vrot.lane.b32.xlu0 %v243, 64
  %v246 = vpop.permute.xlu0 %245
  %v248 = vmul.f32 %v230, %v246
  %250 = vrot.lane.b32.xlu0 %v248, 64
  %v251 = vpop.permute.xlu0 %250
  %253 = vst.msk [vmem:[%s8] sm:$0xff] %vm180, %v251
  %v254 = vld [vmem:[#allocation2 + $0x8] sm:$0xff]
  %v255 = vpack.c.bf16 %v248, %v248
  %257 = vrot.lane.b32.xlu0 %v255, 64
  %v258 = vpop.permute.xlu0 %257
  %v260 = vsel %vm180, %v258, 0
  %262 = vmatprep.subr.bf16.mxu0 0
  %263 = vmatpush1.bf16.msra.mxu0 %v176
  %264 = vmatprep.subr.bf16.mxu0 0
  %265 = vmatpush1.bf16.msra.mxu0 %v177
  %266 = vmatprep.subr.bf16.mxu0 0
  %267 = vmatpush1.bf16.msra.mxu0 0
  %268 = vmatprep.subr.bf16.mxu0 0
  %269 = vmatpush1.bf16.msra.mxu0 0
  %270 = vmatprep.subr.bf16.mxu0 0
  %271 = vmatpush1.bf16.msra.mxu0 0
  %272 = vmatprep.subr.bf16.mxu0 0
  %273 = vmatpush1.bf16.msra.mxu0 0
  %274 = vmatprep.subr.bf16.mxu0 0
  %275 = vmatpush1.bf16.msra.mxu0 0
  %276 = vmatprep.subr.bf16.mxu0 0
  %277 = vmatpush1.bf16.msra.mxu0 0
  %278 = vmatprep.subr.bf16.mxu0 0
  %279 = vmatpush1.bf16.msra.mxu0 0
  %280 = vmatprep.subr.bf16.mxu0 0
  %281 = vmatpush1.bf16.msra.mxu0 0
  %282 = vmatprep.subr.bf16.mxu0 0
  %283 = vmatpush1.bf16.msra.mxu0 0
  %284 = vmatprep.subr.bf16.mxu0 0
  %285 = vmatpush1.bf16.msra.mxu0 0
  %286 = vmatprep.subr.bf16.mxu0 0
  %287 = vmatpush1.bf16.msra.mxu0 0
  %288 = vmatprep.subr.bf16.mxu0 0
  %289 = vmatpush1.bf16.msra.mxu0 0
  %290 = vmatprep.subr.bf16.mxu0 0
  %291 = vmatpush1.bf16.msra.mxu0 0
  %292 = vmatprep.subr.bf16.mxu0 0
  %293 = vmatpush1.bf16.msra.mxu0 0
  %294 = vmatprep.mubr.bf16.mxu0 0
  %295 = vmatmul.mubr.bf16.gmra.mrb[0].mxu0 %v260
  %v296 = vpop.f32.mrb[0].mxu0
  %v297 = vadd.f32 0.0, %v296
  %v298 = vpop.f32.mrb[0].mxu0
  %v299 = vpop.f32.mrb[0].mxu0
  %v300 = vpop.f32.mrb[0].mxu0
  %301 = vdwg.mxu0
  %v302 = vadd.f32 %v254, %v297
  %v303 = vxor.u32 %v302, 2147483648
  %v304 = vmul.f32 %v303, 1.442695
  %v305 = vpow.pop %v304
  %v306 = vadd.f32 %v305, 1.0
  %v307 = vrcp.pop %v306
  %v308 = vmul.f32 1.0, %v307
  %v309 = vtanh.pop %v302
  %v310 = vmul.f32 %v308, %v242
  %312 = vrot.lane.b32.xlu0 %v309, 64
  %v313 = vpop.permute.xlu0 %312
  %v315 = vmul.f32 %v308, %v313
  %317 = vrot.lane.b32.xlu0 %v315, 96
  %v318 = vpop.permute.xlu0 %317
  %v320 = vadd.f32 %v310, %v318
  %v321 = vtanh.pop %v320
  %323 = vrot.lane.b32.xlu0 %v321, 64
  %v324 = vpop.permute.xlu0 %323
  %v326 = vmul.f32 %v308, %v324
  %328 = vrot.lane.b32.xlu0 %v326, 64
  %v329 = vpop.permute.xlu0 %328
  %331 = vst.msk [vmem:[%s8 + $0x8] sm:$0xff] %vm180, %v329
  %v332 = vld [vmem:[#allocation2 + $0x10] sm:$0xff]
  %v333 = vpack.c.bf16 %v326, %v326
  %335 = vrot.lane.b32.xlu0 %v333, 64
  %v336 = vpop.permute.xlu0 %335
  %v338 = vsel %vm180, %v336, 0
  %340 = vmatprep.subr.bf16.mxu0 0
  %341 = vmatpush1.bf16.msra.mxu0 %v176
  %342 = vmatprep.subr.bf16.mxu0 0
  %343 = vmatpush1.bf16.msra.mxu0 %v177
  %344 = vmatprep.subr.bf16.mxu0 0
  %345 = vmatpush1.bf16.msra.mxu0 0
  %346 = vmatprep.subr.bf16.mxu0 0
  %347 = vmatpush1.bf16.msra.mxu0 0
  %348 = vmatprep.subr.bf16.mxu0 0
  %349 = vmatpush1.bf16.msra.mxu0 0
  %350 = vmatprep.subr.bf16.mxu0 0
  %351 = vmatpush1.bf16.msra.mxu0 0
  %352 = vmatprep.subr.bf16.mxu0 0
  %353 = vmatpush1.bf16.msra.mxu0 0
  %354 = vmatprep.subr.bf16.mxu0 0
  %355 = vmatpush1.bf16.msra.mxu0 0
  %356 = vmatprep.subr.bf16.mxu0 0
  %357 = vmatpush1.bf16.msra.mxu0 0
  %358 = vmatprep.subr.bf16.mxu0 0
  %359 = vmatpush1.bf16.msra.mxu0 0
  %360 = vmatprep.subr.bf16.mxu0 0
  %361 = vmatpush1.bf16.msra.mxu0 0
  %362 = vmatprep.subr.bf16.mxu0 0
  %363 = vmatpush1.bf16.msra.mxu0 0
  %364 = vmatprep.subr.bf16.mxu0 0
  %365 = vmatpush1.bf16.msra.mxu0 0
  %366 = vmatprep.subr.bf16.mxu0 0
  %367 = vmatpush1.bf16.msra.mxu0 0
  %368 = vmatprep.subr.bf16.mxu0 0
  %369 = vmatpush1.bf16.msra.mxu0 0
  %370 = vmatprep.subr.bf16.mxu0 0
  %371 = vmatpush1.bf16.msra.mxu0 0
  %372 = vmatprep.mubr.bf16.mxu0 0
  %373 = vmatmul.mubr.bf16.gmra.mrb[0].mxu0 %v338
  %v374 = vpop.f32.mrb[0].mxu0
  %v375 = vadd.f32 0.0, %v374
  %v376 = vpop.f32.mrb[0].mxu0
  %v377 = vpop.f32.mrb[0].mxu0
  %v378 = vpop.f32.mrb[0].mxu0
  %379 = vdwg.mxu0
  %v380 = vadd.f32 %v332, %v375
  %v381 = vxor.u32 %v380, 2147483648
  %v382 = vmul.f32 %v381, 1.442695
  %v383 = vpow.pop %v382
  %v384 = vadd.f32 %v383, 1.0
  %v385 = vrcp.pop %v384
  %v386 = vmul.f32 1.0, %v385
  %v387 = vtanh.pop %v380
  %v388 = vmul.f32 %v386, %v320
  %390 = vrot.lane.b32.xlu0 %v387, 64
  %v391 = vpop.permute.xlu0 %390
  %v393 = vmul.f32 %v386, %v391
  %395 = vrot.lane.b32.xlu0 %v393, 96
  %v396 = vpop.permute.xlu0 %395
  %v398 = vadd.f32 %v388, %v396
  %v399 = vtanh.pop %v398
  %401 = vrot.lane.b32.xlu0 %v399, 64
  %v402 = vpop.permute.xlu0 %401
  %v404 = vmul.f32 %v386, %v402
  %406 = vrot.lane.b32.xlu0 %v404, 64
  %v407 = vpop.permute.xlu0 %406
  %409 = vst.msk [vmem:[%s8 + $0x10] sm:$0xff] %vm180, %v407
  %v410 = vld [vmem:[#allocation2 + $0x18] sm:$0xff]
  %v411 = vpack.c.bf16 %v404, %v404
  %413 = vrot.lane.b32.xlu0 %v411, 64
  %v414 = vpop.permute.xlu0 %413
  %v416 = vsel %vm180, %v414, 0
  %418 = vmatprep.subr.bf16.mxu0 0
  %419 = vmatpush1.bf16.msra.mxu0 %v176
  %420 = vmatprep.subr.bf16.mxu0 0
  %421 = vmatpush1.bf16.msra.mxu0 %v177
  %422 = vmatprep.subr.bf16.mxu0 0
  %423 = vmatpush1.bf16.msra.mxu0 0
  %424 = vmatprep.subr.bf16.mxu0 0
  %425 = vmatpush1.bf16.msra.mxu0 0
  %426 = vmatprep.subr.bf16.mxu0 0
  %427 = vmatpush1.bf16.msra.mxu0 0
  %428 = vmatprep.subr.bf16.mxu0 0
  %429 = vmatpush1.bf16.msra.mxu0 0
  %430 = vmatprep.subr.bf16.mxu0 0
  %431 = vmatpush1.bf16.msra.mxu0 0
  %432 = vmatprep.subr.bf16.mxu0 0
  %433 = vmatpush1.bf16.msra.mxu0 0
  %434 = vmatprep.subr.bf16.mxu0 0
  %435 = vmatpush1.bf16.msra.mxu0 0
  %436 = vmatprep.subr.bf16.mxu0 0
  %437 = vmatpush1.bf16.msra.mxu0 0
  %438 = vmatprep.subr.bf16.mxu0 0
  %439 = vmatpush1.bf16.msra.mxu0 0
  %440 = vmatprep.subr.bf16.mxu0 0
  %441 = vmatpush1.bf16.msra.mxu0 0
  %442 = vmatprep.subr.bf16.mxu0 0
  %443 = vmatpush1.bf16.msra.mxu0 0
  %444 = vmatprep.subr.bf16.mxu0 0
  %445 = vmatpush1.bf16.msra.mxu0 0
  %446 = vmatprep.subr.bf16.mxu0 0
  %447 = vmatpush1.bf16.msra.mxu0 0
  %448 = vmatprep.subr.bf16.mxu0 0
  %449 = vmatpush1.bf16.msra.mxu0 0
  %450 = vmatprep.mubr.bf16.mxu0 0
  %451 = vmatmul.mubr.bf16.gmra.mrb[0].mxu0 %v416
  %v452 = vpop.f32.mrb[0].mxu0
  %v453 = vadd.f32 0.0, %v452
  %v454 = vpop.f32.mrb[0].mxu0
  %v455 = vpop.f32.mrb[0].mxu0
  %v456 = vpop.f32.mrb[0].mxu0
  %457 = vdwg.mxu0
  %v458 = vadd.f32 %v410, %v453
  %v459 = vxor.u32 %v458, 2147483648
  %v460 = vmul.f32 %v459, 1.442695
  %v461 = vpow.pop %v460
  %v462 = vadd.f32 %v461, 1.0
  %v463 = vrcp.pop %v462
  %v464 = vmul.f32 1.0, %v463
  %v465 = vtanh.pop %v458
  %v466 = vmul.f32 %v464, %v398
  %468 = vrot.lane.b32.xlu0 %v465, 64
  %v469 = vpop.permute.xlu0 %468
  %v471 = vmul.f32 %v464, %v469
  %473 = vrot.lane.b32.xlu0 %v471, 96
  %v474 = vpop.permute.xlu0 %473
  %v476 = vadd.f32 %v466, %v474
  %v477 = vtanh.pop %v476
  %479 = vrot.lane.b32.xlu0 %v477, 64
  %v480 = vpop.permute.xlu0 %479
  %v482 = vmul.f32 %v464, %v480
  %484 = vrot.lane.b32.xlu0 %v482, 64
  %v485 = vpop.permute.xlu0 %484
  %487 = vst.msk [vmem:[%s8 + $0x18] sm:$0xff] %vm180, %v485
  %v488 = vld [vmem:[#allocation2 + $0x20] sm:$0xff]
  %v489 = vpack.c.bf16 %v482, %v482
  %491 = vrot.lane.b32.xlu0 %v489, 64
  %v492 = vpop.permute.xlu0 %491
  %v494 = vsel %vm180, %v492, 0
  %496 = vmatprep.subr.bf16.mxu0 0
  %497 = vmatpush1.bf16.msra.mxu0 %v176
  %498 = vmatprep.subr.bf16.mxu0 0
  %499 = vmatpush1.bf16.msra.mxu0 %v177
  %500 = vmatprep.subr.bf16.mxu0 0
  %501 = vmatpush1.bf16.msra.mxu0 0
  %502 = vmatprep.subr.bf16.mxu0 0
  %503 = vmatpush1.bf16.msra.mxu0 0
  %504 = vmatprep.subr.bf16.mxu0 0
  %505 = vmatpush1.bf16.msra.mxu0 0
  %506 = vmatprep.subr.bf16.mxu0 0
  %507 = vmatpush1.bf16.msra.mxu0 0
  %508 = vmatprep.subr.bf16.mxu0 0
  %509 = vmatpush1.bf16.msra.mxu0 0
  %510 = vmatprep.subr.bf16.mxu0 0
  %511 = vmatpush1.bf16.msra.mxu0 0
  %512 = vmatprep.subr.bf16.mxu0 0
  %513 = vmatpush1.bf16.msra.mxu0 0
  %514 = vmatprep.subr.bf16.mxu0 0
  %515 = vmatpush1.bf16.msra.mxu0 0
  %516 = vmatprep.subr.bf16.mxu0 0
  %517 = vmatpush1.bf16.msra.mxu0 0
  %518 = vmatprep.subr.bf16.mxu0 0
  %519 = vmatpush1.bf16.msra.mxu0 0
  %520 = vmatprep.subr.bf16.mxu0 0
  %521 = vmatpush1.bf16.msra.mxu0 0
  %522 = vmatprep.subr.bf16.mxu0 0
  %523 = vmatpush1.bf16.msra.mxu0 0
  %524 = vmatprep.subr.bf16.mxu0 0
  %525 = vmatpush1.bf16.msra.mxu0 0
  %526 = vmatprep.subr.bf16.mxu0 0
  %527 = vmatpush1.bf16.msra.mxu0 0
  %528 = vmatprep.mubr.bf16.mxu0 0
  %529 = vmatmul.mubr.bf16.gmra.mrb[0].mxu0 %v494
  %v530 = vpop.f32.mrb[0].mxu0
  %v531 = vadd.f32 0.0, %v530
  %v532 = vpop.f32.mrb[0].mxu0
  %v533 = vpop.f32.mrb[0].mxu0
  %v534 = vpop.f32.mrb[0].mxu0
  %535 = vdwg.mxu0
  %v536 = vadd.f32 %v488, %v531
  %v537 = vxor.u32 %v536, 2147483648
  %v538 = vmul.f32 %v537, 1.442695
  %v539 = vpow.pop %v538
  %v540 = vadd.f32 %v539, 1.0
  %v541 = vrcp.pop %v540
  %v542 = vmul.f32 1.0, %v541
  %v543 = vtanh.pop %v536
  %v544 = vmul.f32 %v542, %v476
  %546 = vrot.lane.b32.xlu0 %v543, 64
  %v547 = vpop.permute.xlu0 %546
  %v549 = vmul.f32 %v542, %v547
  %551 = vrot.lane.b32.xlu0 %v549, 96
  %v552 = vpop.permute.xlu0 %551
  %v554 = vadd.f32 %v544, %v552
  %v555 = vtanh.pop %v554
  %557 = vrot.lane.b32.xlu0 %v555, 64
  %v558 = vpop.permute.xlu0 %557
  %v560 = vmul.f32 %v542, %v558
  %562 = vrot.lane.b32.xlu0 %v560, 64
  %v563 = vpop.permute.xlu0 %562
  %565 = vst.msk [vmem:[%s8 + $0x20] sm:$0xff] %vm180, %v563
  %v566 = vld [vmem:[#allocation2 + $0x28] sm:$0xff]
  %v567 = vpack.c.bf16 %v560, %v560
  %569 = vrot.lane.b32.xlu0 %v567, 64
  %v570 = vpop.permute.xlu0 %569
  %v572 = vsel %vm180, %v570, 0
  %574 = vmatprep.subr.bf16.mxu0 0
  %575 = vmatpush1.bf16.msra.mxu0 %v176
  %576 = vmatprep.subr.bf16.mxu0 0
  %577 = vmatpush1.bf16.msra.mxu0 %v177
  %578 = vmatprep.subr.bf16.mxu0 0
  %579 = vmatpush1.bf16.msra.mxu0 0
  %580 = vmatprep.subr.bf16.mxu0 0
  %581 = vmatpush1.bf16.msra.mxu0 0
  %582 = vmatprep.subr.bf16.mxu0 0
  %583 = vmatpush1.bf16.msra.mxu0 0
  %584 = vmatprep.subr.bf16.mxu0 0
  %585 = vmatpush1.bf16.msra.mxu0 0
  %586 = vmatprep.subr.bf16.mxu0 0
  %587 = vmatpush1.bf16.msra.mxu0 0
  %588 = vmatprep.subr.bf16.mxu0 0
  %589 = vmatpush1.bf16.msra.mxu0 0
  %590 = vmatprep.subr.bf16.mxu0 0
  %591 = vmatpush1.bf16.msra.mxu0 0
  %592 = vmatprep.subr.bf16.mxu0 0
  %593 = vmatpush1.bf16.msra.mxu0 0
  %594 = vmatprep.subr.bf16.mxu0 0
  %595 = vmatpush1.bf16.msra.mxu0 0
  %596 = vmatprep.subr.bf16.mxu0 0
  %597 = vmatpush1.bf16.msra.mxu0 0
  %598 = vmatprep.subr.bf16.mxu0 0
  %599 = vmatpush1.bf16.msra.mxu0 0
  %600 = vmatprep.subr.bf16.mxu0 0
  %601 = vmatpush1.bf16.msra.mxu0 0
  %602 = vmatprep.subr.bf16.mxu0 0
  %603 = vmatpush1.bf16.msra.mxu0 0
  %604 = vmatprep.subr.bf16.mxu0 0
  %605 = vmatpush1.bf16.msra.mxu0 0
  %606 = vmatprep.mubr.bf16.mxu0 0
  %607 = vmatmul.mubr.bf16.gmra.mrb[0].mxu0 %v572
  %v608 = vpop.f32.mrb[0].mxu0
  %v609 = vadd.f32 0.0, %v608
  %v610 = vpop.f32.mrb[0].mxu0
  %v611 = vpop.f32.mrb[0].mxu0
  %v612 = vpop.f32.mrb[0].mxu0
  %613 = vdwg.mxu0
  %v614 = vadd.f32 %v566, %v609
  %v615 = vxor.u32 %v614, 2147483648
  %v616 = vmul.f32 %v615, 1.442695
  %v617 = vpow.pop %v616
  %v618 = vadd.f32 %v617, 1.0
  %v619 = vrcp.pop %v618
  %v620 = vmul.f32 1.0, %v619
  %v621 = vtanh.pop %v614
  %v622 = vmul.f32 %v620, %v554
  %624 = vrot.lane.b32.xlu0 %v621, 64
  %v625 = vpop.permute.xlu0 %624
  %v627 = vmul.f32 %v620, %v625
  %629 = vrot.lane.b32.xlu0 %v627, 96
  %v630 = vpop.permute.xlu0 %629
  %v632 = vadd.f32 %v622, %v630
  %v633 = vtanh.pop %v632
  %635 = vrot.lane.b32.xlu0 %v633, 64
  %v636 = vpop.permute.xlu0 %635
  %v638 = vmul.f32 %v620, %v636
  %640 = vrot.lane.b32.xlu0 %v638, 64
  %v641 = vpop.permute.xlu0 %640
  %643 = vst.msk [vmem:[%s8 + $0x28] sm:$0xff] %vm180, %v641
  %v644 = vld [vmem:[#allocation2 + $0x30] sm:$0xff]
  %v645 = vpack.c.bf16 %v638, %v638
  %647 = vrot.lane.b32.xlu0 %v645, 64
  %v648 = vpop.permute.xlu0 %647
  %v650 = vsel %vm180, %v648, 0
  %652 = vmatprep.subr.bf16.mxu0 0
  %653 = vmatpush1.bf16.msra.mxu0 %v176
  %654 = vmatprep.subr.bf16.mxu0 0
  %655 = vmatpush1.bf16.msra.mxu0 %v177
  %656 = vmatprep.subr.bf16.mxu0 0
  %657 = vmatpush1.bf16.msra.mxu0 0
  %658 = vmatprep.subr.bf16.mxu0 0
  %659 = vmatpush1.bf16.msra.mxu0 0
  %660 = vmatprep.subr.bf16.mxu0 0
  %661 = vmatpush1.bf16.msra.mxu0 0
  %662 = vmatprep.subr.bf16.mxu0 0
  %663 = vmatpush1.bf16.msra.mxu0 0
  %664 = vmatprep.subr.bf16.mxu0 0
  %665 = vmatpush1.bf16.msra.mxu0 0
  %666 = vmatprep.subr.bf16.mxu0 0
  %667 = vmatpush1.bf16.msra.mxu0 0
  %668 = vmatprep.subr.bf16.mxu0 0
  %669 = vmatpush1.bf16.msra.mxu0 0
  %670 = vmatprep.subr.bf16.mxu0 0
  %671 = vmatpush1.bf16.msra.mxu0 0
  %672 = vmatprep.subr.bf16.mxu0 0
  %673 = vmatpush1.bf16.msra.mxu0 0
  %674 = vmatprep.subr.bf16.mxu0 0
  %675 = vmatpush1.bf16.msra.mxu0 0
  %676 = vmatprep.subr.bf16.mxu0 0
  %677 = vmatpush1.bf16.msra.mxu0 0
  %678 = vmatprep.subr.bf16.mxu0 0
  %679 = vmatpush1.bf16.msra.mxu0 0
  %680 = vmatprep.subr.bf16.mxu0 0
  %681 = vmatpush1.bf16.msra.mxu0 0
  %682 = vmatprep.subr.bf16.mxu0 0
  %683 = vmatpush1.bf16.msra.mxu0 0
  %684 = vmatprep.mubr.bf16.mxu0 0
  %685 = vmatmul.mubr.bf16.gmra.mrb[0].mxu0 %v650
  %v686 = vpop.f32.mrb[0].mxu0
  %v687 = vadd.f32 0.0, %v686
  %v688 = vpop.f32.mrb[0].mxu0
  %v689 = vpop.f32.mrb[0].mxu0
  %v690 = vpop.f32.mrb[0].mxu0
  %691 = vdwg.mxu0
  %v692 = vadd.f32 %v644, %v687
  %v693 = vxor.u32 %v692, 2147483648
  %v694 = vmul.f32 %v693, 1.442695
  %v695 = vpow.pop %v694
  %v696 = vadd.f32 %v695, 1.0
  %v697 = vrcp.pop %v696
  %v698 = vmul.f32 1.0, %v697
  %v699 = vtanh.pop %v692
  %v700 = vmul.f32 %v698, %v632
  %702 = vrot.lane.b32.xlu0 %v699, 64
  %v703 = vpop.permute.xlu0 %702
  %v705 = vmul.f32 %v698, %v703
  %707 = vrot.lane.b32.xlu0 %v705, 96
  %v708 = vpop.permute.xlu0 %707
  %v710 = vadd.f32 %v700, %v708
  %v711 = vtanh.pop %v710
  %713 = vrot.lane.b32.xlu0 %v711, 64
  %v714 = vpop.permute.xlu0 %713
  %v716 = vmul.f32 %v698, %v714
  %718 = vrot.lane.b32.xlu0 %v716, 64
  %v719 = vpop.permute.xlu0 %718
  %721 = vst.msk [vmem:[%s8 + $0x30] sm:$0xff] %vm180, %v719
  %v722 = vld [vmem:[#allocation2 + $0x38] sm:$0xff]
  %v723 = vpack.c.bf16 %v716, %v716
  %725 = vrot.lane.b32.xlu0 %v723, 64
  %v726 = vpop.permute.xlu0 %725
  %v728 = vsel %vm180, %v726, 0
  %730 = vmatprep.subr.bf16.mxu0 0
  %731 = vmatpush1.bf16.msra.mxu0 %v176
  %732 = vmatprep.subr.bf16.mxu0 0
  %733 = vmatpush1.bf16.msra.mxu0 %v177
  %734 = vmatprep.subr.bf16.mxu0 0
  %735 = vmatpush1.bf16.msra.mxu0 0
  %736 = vmatprep.subr.bf16.mxu0 0
  %737 = vmatpush1.bf16.msra.mxu0 0
  %738 = vmatprep.subr.bf16.mxu0 0
  %739 = vmatpush1.bf16.msra.mxu0 0
  %740 = vmatprep.subr.bf16.mxu0 0
  %741 = vmatpush1.bf16.msra.mxu0 0
  %742 = vmatprep.subr.bf16.mxu0 0
  %743 = vmatpush1.bf16.msra.mxu0 0
  %744 = vmatprep.subr.bf16.mxu0 0
  %745 = vmatpush1.bf16.msra.mxu0 0
  %746 = vmatprep.subr.bf16.mxu0 0
  %747 = vmatpush1.bf16.msra.mxu0 0
  %748 = vmatprep.subr.bf16.mxu0 0
  %749 = vmatpush1.bf16.msra.mxu0 0
  %750 = vmatprep.subr.bf16.mxu0 0
  %751 = vmatpush1.bf16.msra.mxu0 0
  %752 = vmatprep.subr.bf16.mxu0 0
  %753 = vmatpush1.bf16.msra.mxu0 0
  %754 = vmatprep.subr.bf16.mxu0 0
  %755 = vmatpush1.bf16.msra.mxu0 0
  %756 = vmatprep.subr.bf16.mxu0 0
  %757 = vmatpush1.bf16.msra.mxu0 0
  %758 = vmatprep.subr.bf16.mxu0 0
  %759 = vmatpush1.bf16.msra.mxu0 0
  %760 = vmatprep.subr.bf16.mxu0 0
  %761 = vmatpush1.bf16.msra.mxu0 0
  %762 = vmatprep.mubr.bf16.mxu0 0
  %763 = vmatmul.mubr.bf16.gmra.mrb[0].mxu0 %v728
  %v764 = vpop.f32.mrb[0].mxu0
  %v765 = vadd.f32 0.0, %v764
  %v766 = vpop.f32.mrb[0].mxu0
  %v767 = vpop.f32.mrb[0].mxu0
  %v768 = vpop.f32.mrb[0].mxu0
  %769 = vdwg.mxu0
  %v770 = vadd.f32 %v722, %v765
  %v771 = vxor.u32 %v770, 2147483648
  %v772 = vmul.f32 %v771, 1.442695
  %v773 = vpow.pop %v772
  %v774 = vadd.f32 %v773, 1.0
  %v775 = vrcp.pop %v774
  %v776 = vmul.f32 1.0, %v775
  %v777 = vtanh.pop %v770
  %v778 = vmul.f32 %v776, %v710
  %780 = vrot.lane.b32.xlu0 %v777, 64
  %v781 = vpop.permute.xlu0 %780
  %v783 = vmul.f32 %v776, %v781
  %785 = vrot.lane.b32.xlu0 %v783, 96
  %v786 = vpop.permute.xlu0 %785
  %v788 = vadd.f32 %v778, %v786
  %v789 = vtanh.pop %v788
  %791 = vrot.lane.b32.xlu0 %v789, 64
  %v792 = vpop.permute.xlu0 %791
  %v794 = vmul.f32 %v776, %v792
  %796 = vrot.lane.b32.xlu0 %v794, 64
  %v797 = vpop.permute.xlu0 %796
  %799 = vst.msk [vmem:[%s8 + $0x38] sm:$0xff] %vm180, %v797
  %v800 = vld [vmem:[%s8] sm:$0xff]
  %v801 = vld [vmem:[%s8 + $0x8] sm:$0xff]
  %v802 = vld [vmem:[%s8 + $0x10] sm:$0xff]
  %v803 = vld [vmem:[%s8 + $0x18] sm:$0xff]
  %v804 = vld [vmem:[%s8 + $0x20] sm:$0xff]
  %v805 = vld [vmem:[%s8 + $0x28] sm:$0xff]
  %v806 = vld [vmem:[%s8 + $0x30] sm:$0xff]
  %v807 = vld [vmem:[%s8 + $0x38] sm:$0xff]
  %v808 = vld [vmem:[%s4] sm:$0xf]
  %v809 = vld [vmem:[%s4 + $0x4] sm:$0xf]
  %v810 = vld [vmem:[%s4 + $0x8] sm:$0xf]
  %v811 = vld [vmem:[%s4 + $0xc] sm:$0xf]
  %v812 = vld [vmem:[%s5] sm:$0x1]
  %v813 = vpack.c.bf16 %v801, %v800
  %v814 = vpack.c.bf16 %v803, %v802
  %v815 = vpack.c.bf16 %v805, %v804
  %v816 = vpack.c.bf16 %v807, %v806
  %v818 = vlaneseq
  %v819 = vshrl.u32 %v818, 7
  %v820 = vsub.s32 0, %v819
  %v821 = vrot.slane %v812, %v820
  %v827 = vunpack.c.l.b16 %v808
  %v828 = vunpack.c.l.b16 %v809
  %v829 = vunpack.c.l.b16 %v810
  %v830 = vunpack.c.l.b16 %v811
  %v831 = vpack.c.b16 %v828, %v827
  %v832 = vpack.c.b16 %v830, %v829
  %v836 = vsel %vm180, %v813, 0
  %v839 = vsel %vm180, %v814, 0
  %v842 = vsel %vm180, %v815, 0
  %v845 = vsel %vm180, %v816, 0
  %847 = vmatprep.subr.bf16.mxu0 0
  %848 = vmatpush1.bf16.msra.mxu0 %v831
  %849 = vmatprep.subr.bf16.mxu0 0
  %850 = vmatpush1.bf16.msra.mxu0 %v832
  %851 = vmatprep.subr.bf16.mxu0 0
  %852 = vmatpush1.bf16.msra.mxu0 0
  %853 = vmatprep.subr.bf16.mxu0 0
  %854 = vmatpush1.bf16.msra.mxu0 0
  %855 = vmatprep.subr.bf16.mxu0 0
  %856 = vmatpush1.bf16.msra.mxu0 0
  %857 = vmatprep.subr.bf16.mxu0 0
  %858 = vmatpush1.bf16.msra.mxu0 0
  %859 = vmatprep.subr.bf16.mxu0 0
  %860 = vmatpush1.bf16.msra.mxu0 0
  %861 = vmatprep.subr.bf16.mxu0 0
  %862 = vmatpush1.bf16.msra.mxu0 0
  %863 = vmatprep.subr.bf16.mxu0 0
  %864 = vmatpush1.bf16.msra.mxu0 0
  %865 = vmatprep.subr.bf16.mxu0 0
  %866 = vmatpush1.bf16.msra.mxu0 0
  %867 = vmatprep.subr.bf16.mxu0 0
  %868 = vmatpush1.bf16.msra.mxu0 0
  %869 = vmatprep.subr.bf16.mxu0 0
  %870 = vmatpush1.bf16.msra.mxu0 0
  %871 = vmatprep.subr.bf16.mxu0 0
  %872 = vmatpush1.bf16.msra.mxu0 0
  %873 = vmatprep.subr.bf16.mxu0 0
  %874 = vmatpush1.bf16.msra.mxu0 0
  %875 = vmatprep.subr.bf16.mxu0 0
  %876 = vmatpush1.bf16.msra.mxu0 0
  %877 = vmatprep.subr.bf16.mxu0 0
  %878 = vmatpush1.bf16.msra.mxu0 0
  %879 = vmatprep.mubr.bf16.mxu0 0
  %880 = vmatmul.mubr.bf16.gmra.mrb[0].mxu0 %v836
  %v881 = vpop.f32.mrb[0].mxu0
  %v882 = vadd.f32 %v821, %v881
  %v883 = vpop.f32.mrb[0].mxu0
  %v884 = vpop.f32.mrb[0].mxu0
  %v885 = vadd.f32 %v821, %v884
  %v886 = vpop.f32.mrb[0].mxu0
  %887 = vmatprep.mubr.bf16.mxu0 0
  %888 = vmatmul.mubr.bf16.gmra.mrb[0].mxu0 %v839
  %v889 = vpop.f32.mrb[0].mxu0
  %v890 = vadd.f32 %v821, %v889
  %v891 = vpop.f32.mrb[0].mxu0
  %v892 = vpop.f32.mrb[0].mxu0
  %v893 = vadd.f32 %v821, %v892
  %v894 = vpop.f32.mrb[0].mxu0
  %895 = vmatprep.mubr.bf16.mxu0 0
  %896 = vmatmul.mubr.bf16.gmra.mrb[0].mxu0 %v842
  %v897 = vpop.f32.mrb[0].mxu0
  %v898 = vadd.f32 %v821, %v897
  %v899 = vpop.f32.mrb[0].mxu0
  %v900 = vpop.f32.mrb[0].mxu0
  %v901 = vadd.f32 %v821, %v900
  %v902 = vpop.f32.mrb[0].mxu0
  %903 = vmatprep.mubr.bf16.mxu0 0
  %904 = vmatmul.mubr.bf16.gmra.mrb[0].mxu0 %v845
  %v905 = vpop.f32.mrb[0].mxu0
  %v906 = vadd.f32 %v821, %v905
  %v907 = vpop.f32.mrb[0].mxu0
  %v908 = vpop.f32.mrb[0].mxu0
  %v909 = vadd.f32 %v821, %v908
  %v910 = vpop.f32.mrb[0].mxu0
  %911 = vdwg.mxu0
  %v912 = vmax.f32 %v882, 0.0
  %v913 = vmax.f32 %v885, 0.0
  %v914 = vmax.f32 %v890, 0.0
  %v915 = vmax.f32 %v893, 0.0
  %v916 = vmax.f32 %v898, 0.0
  %v917 = vmax.f32 %v901, 0.0
  %v918 = vmax.f32 %v906, 0.0
  %v919 = vmax.f32 %v909, 0.0
  %v920 = vld [vmem:[%s6] sm:$0x1]
  %v921 = vld [vmem:[#allocation3] sm:$0x1]
  %v923 = vlaneseq
  %v924 = vshrl.u32 %v923, 7
  %v925 = vsub.s32 0, %v924
  %v926 = vrot.slane %v920, %v925
  %v928 = vmul.f32 %v912, %v926
  %v929 = vmul.f32 %v913, %v926
  %v930 = vmul.f32 %v914, %v926
  %v931 = vmul.f32 %v915, %v926
  %v932 = vmul.f32 %v916, %v926
  %v933 = vmul.f32 %v917, %v926
  %v934 = vmul.f32 %v918, %v926
  %v935 = vmul.f32 %v919, %v926
  %v936 = vsel %vm77, %v928, 0.0
  %937 = vadd.xlane.f32.xlu0 %v936
  %v938 = vpop.xlane.xlu0 %937
  %v939 = vsel %vm77, %v929, 0.0
  %940 = vadd.xlane.f32.xlu0 %v939
  %v941 = vpop.xlane.xlu0 %940
  %v942 = vsel %vm77, %v930, 0.0
  %943 = vadd.xlane.f32.xlu0 %v942
  %v944 = vpop.xlane.xlu0 %943
  %v945 = vsel %vm77, %v931, 0.0
  %946 = vadd.xlane.f32.xlu0 %v945
  %v947 = vpop.xlane.xlu0 %946
  %v948 = vsel %vm77, %v932, 0.0
  %949 = vadd.xlane.f32.xlu0 %v948
  %v950 = vpop.xlane.xlu0 %949
  %v951 = vsel %vm77, %v933, 0.0
  %952 = vadd.xlane.f32.xlu0 %v951
  %v953 = vpop.xlane.xlu0 %952
  %v954 = vsel %vm77, %v934, 0.0
  %955 = vadd.xlane.f32.xlu0 %v954
  %v956 = vpop.xlane.xlu0 %955
  %v957 = vsel %vm77, %v935, 0.0
  %958 = vadd.xlane.f32.xlu0 %v957
  %v959 = vpop.xlane.xlu0 %958
  %v961 = vlaneseq
  %v962 = vshrl.u32 %v961, 7
  %v963 = vsub.s32 0, %v962
  %v964 = vrot.slane %v921, %v963
  %v966 = vadd.f32 %v938, %v964
  %v967 = vadd.f32 %v941, %v964
  %v968 = vadd.f32 %v944, %v964
  %v969 = vadd.f32 %v947, %v964
  %v970 = vadd.f32 %v950, %v964
  %v971 = vadd.f32 %v953, %v964
  %v972 = vadd.f32 %v956, %v964
  %v973 = vadd.f32 %v959, %v964
  %v974 = vxor.u32 %v966, 2147483648
  %v975 = vxor.u32 %v967, 2147483648
  %v976 = vxor.u32 %v968, 2147483648
  %v977 = vxor.u32 %v969, 2147483648
  %v978 = vxor.u32 %v970, 2147483648
  %v979 = vxor.u32 %v971, 2147483648
  %v980 = vxor.u32 %v972, 2147483648
  %v981 = vxor.u32 %v973, 2147483648
  %v982 = vmul.f32 %v974, 1.442695
  %v983 = vpow.pop %v982
  %v984 = vmul.f32 %v975, 1.442695
  %v985 = vpow.pop %v984
  %v986 = vmul.f32 %v976, 1.442695
  %v987 = vpow.pop %v986
  %v988 = vmul.f32 %v977, 1.442695
  %v989 = vpow.pop %v988
  %v990 = vmul.f32 %v978, 1.442695
  %v991 = vpow.pop %v990
  %v992 = vmul.f32 %v979, 1.442695
  %v993 = vpow.pop %v992
  %v994 = vmul.f32 %v980, 1.442695
  %v995 = vpow.pop %v994
  %v996 = vmul.f32 %v981, 1.442695
  %v997 = vpow.pop %v996
  %v998 = vadd.f32 %v983, 1.0
  %v999 = vadd.f32 %v985, 1.0
  %v1000 = vadd.f32 %v987, 1.0
  %v1001 = vadd.f32 %v989, 1.0
  %v1002 = vadd.f32 %v991, 1.0
  %v1003 = vadd.f32 %v993, 1.0
  %v1004 = vadd.f32 %v995, 1.0
  %v1005 = vadd.f32 %v997, 1.0
  %v1006 = vrcp.pop %v998
  %v1007 = vmul.f32 1.0, %v1006
  %v1008 = vrcp.pop %v999
  %v1009 = vmul.f32 1.0, %v1008
  %v1010 = vrcp.pop %v1000
  %v1011 = vmul.f32 1.0, %v1010
  %v1012 = vrcp.pop %v1001
  %v1013 = vmul.f32 1.0, %v1012
  %v1014 = vrcp.pop %v1002
  %v1015 = vmul.f32 1.0, %v1014
  %v1016 = vrcp.pop %v1003
  %v1017 = vmul.f32 1.0, %v1016
  %v1018 = vrcp.pop %v1004
  %v1019 = vmul.f32 1.0, %v1018
  %v1020 = vrcp.pop %v1005
  %v1021 = vmul.f32 1.0, %v1020
  %vm1022 = vcmask 7168
  %1023 = vst.msk [vmem:[%s9] sm:$0xff] %vm1022, %v1007
  %1024 = vst.msk [vmem:[%s9 + $0x8] sm:$0xff] %vm1022, %v1009
  %1025 = vst.msk [vmem:[%s9 + $0x10] sm:$0xff] %vm1022, %v1011
  %1026 = vst.msk [vmem:[%s9 + $0x18] sm:$0xff] %vm1022, %v1013
  %1027 = vst.msk [vmem:[%s9 + $0x20] sm:$0xff] %vm1022, %v1015
  %1028 = vst.msk [vmem:[%s9 + $0x28] sm:$0xff] %vm1022, %v1017
  %1029 = vst.msk [vmem:[%s9 + $0x30] sm:$0xff] %vm1022, %v1019
  %1030 = vst.msk [vmem:[%s9 + $0x38] sm:$0xff] %vm1022, %v1021
  // Predicated region
  $region34: #{tpu_custom_call.1} parent=0 // pred_check
    _
  $region35: #{tpu_custom_call.1} parent=0 // pred_check_branch
    %1032 = sbr.rel (0) target = $region37
  $region36: #{tpu_custom_call.1} parent=0 // pred_region
    _
  $region37: #{tpu_custom_call.1} parent=0 // pred_fallthru
    _
  // Predicated region
  $region38: #{tpu_custom_call.1} parent=0 // pred_check
    _
  $region39: #{tpu_custom_call.1} parent=0 // pred_check_branch
    %1034 = sbr.rel (0) target = $region41
  $region40: #{tpu_custom_call.1} parent=0 // pred_region
    _
  $region41: #{tpu_custom_call.1} parent=0 // pred_fallthru
    _
  // Predicated region
  $region42: #{tpu_custom_call.1} parent=0 // pred_check
    _
  $region43: #{tpu_custom_call.1} parent=0 // pred_check_branch
    %1036 = sbr.rel (0) target = $region45
  $region44: #{tpu_custom_call.1} parent=0 // pred_region
    _
  $region45: #{tpu_custom_call.1} parent=0 // pred_fallthru
    _
  // Predicated region
  $region46: #{tpu_custom_call.1} parent=0 // pred_check
    _
  $region47: #{tpu_custom_call.1} parent=0 // pred_check_branch
    %1038 = sbr.rel (0) target = $region49
  $region48: #{tpu_custom_call.1} parent=0 // pred_region
    _
  $region49: #{tpu_custom_call.1} parent=0 // pred_fallthru
    _

</llo_original>
